<compile_context>
chip_gen: v7x
topology: tpu7x:2x2x1
jax: 0.10.0
libtpu: 0.0.40
codegen_flags: <defaults>
</compile_context>

<pallas_src>
import jax
import jax.numpy as jnp
from jax import lax
from jax.experimental import pallas as pl
from jax.experimental.pallas import tpu as pltpu

# ----------------------------- configuration -------------------------------
N_VOCABS = 50
CHANNELS = 32              # torch module default is 512; small synthetic size
KERNEL = 5
DEPTH = 3
PAD = (KERNEL - 1) // 2
HIDDEN = CHANNELS // 2     # LSTM hidden size per direction (H); 8H = 128 lanes
OUT_LANES = max(128, 2 * HIDDEN)   # lane-dense output width at the toy config


def _round_up(x, m):
    return (x + m - 1) // m * m


# --------------------------- fused encoder kernel ---------------------------
def _make_encoder_kernel(BP, T, C, H):
    TBP = T * BP                 # rows per full sequence batch (time-major flat)
    PADR = PAD * BP              # conv zero-pad rows (multiple of 8 since BP is)
    G = 8 * H                    # fused two-direction gate width (128 lanes)
    TWO_H = 2 * H                # fused two-direction state width

    def kernel(ids_ref, len_ref, emb_ref, cw_ref, cs_ref, csh_ref,
               wih_ref, whh_ref, b_ref, o_ref, buf_ref, gx_ref):
        # ids_ref : (T*BP, 1) int32   time-major flat token ids (pad rows = 0)
        # len_ref : (BP, 1)   f32     per-row valid lengths (pad rows = 0)
        # emb_ref : (V, C)    bf16    embedding table
        # cw_ref  : (DEPTH, K*C, C) bf16  im2col conv weights
        # cs_ref  : (DEPTH, 1, C) f32     folded BN(eval) scale
        # csh_ref : (DEPTH, 1, C) f32     folded BN(eval) shift (incl. conv bias)
        # wih_ref : (C, 8H)   bf16   gate-interleaved [i_f i_b f_f f_b g_f g_b o_f o_b]
        # whh_ref : (2H, 8H)  bf16   block weights (fwd h -> fwd gates, bwd h -> bwd gates)
        # b_ref   : (1, 8H)   f32    combined b_ih + b_hh, gate-interleaved
        # o_ref   : (BP, OUT_LANES) f32  lanes [0:2H] = [h_bwd | h_fwd], rest zero
        # buf_ref : ((T+2*PAD)*BP, C) bf16  persistent zero-padded conv buffer
        # gx_ref  : (T*BP, 8H) f32   hoisted, direction-aligned gate projections

        # ---- fused embedding gather: one-hot matmul on the MXU ----
        ids = ids_ref[...]                                            # (TBP, 1)
        vocab_iota = lax.broadcasted_iota(jnp.int32, (TBP, N_VOCABS), 1)
        onehot = jnp.where(ids == vocab_iota, 1.0, 0.0).astype(jnp.bfloat16)
        emb = jnp.dot(onehot, emb_ref[...],
                      preferred_element_type=jnp.float32)             # (TBP, C)

        # ---- CNN stack: persistent padded scratch + one im2col matmul / depth ----
        buf_ref[...] = jnp.zeros_like(buf_ref)            # pad rows zeroed once
        buf_ref[PADR:PADR + TBP, :] = emb.astype(jnp.bfloat16)
        act = None
        for d in range(DEPTH):                            # DEPTH=3, static
            # shift by k timesteps == shift by k*BP flat rows; padding rows keep
            # batch boundaries from mixing
            cols = jnp.concatenate(
                [buf_ref[k * BP:k * BP + TBP, :] for k in range(KERNEL)], axis=-1)
            acc = jnp.dot(cols, cw_ref[d],
                          preferred_element_type=jnp.float32)          # (TBP, C)
            act = jnp.maximum(acc * cs_ref[d] + csh_ref[d], 0.0)       # BN(eval)+ReLU
            if d < DEPTH - 1:
                buf_ref[PADR:PADR + TBP, :] = act.astype(jnp.bfloat16)

        # ---- LSTM input projection hoisted out of the recurrence ----
        gx = jnp.dot(act.astype(jnp.bfloat16), wih_ref[...],
                     preferred_element_type=jnp.float32) + b_ref[...]  # (TBP, 8H)
        gx_ref[...] = gx

        # lane masks (full shape up-front; no broadcasts inside the loops)
        lane_g = lax.broadcasted_iota(jnp.int32, (BP, G), 1)
        is_fwd_gate = (lane_g % TWO_H) < H                 # (BP, 8H)
        lane_s = lax.broadcasted_iota(jnp.int32, (BP, TWO_H), 1)
        is_fwd_state = lane_s < H                          # (BP, 2H)
        lengths = len_ref[...]                             # (BP, 1) f32

        # ---- direction-align gx in place (non-serial; off the critical chain):
        #      row block t gets fwd-gate lanes from gx[t], bwd-gate lanes from
        #      gx[T-1-t]; pairs (t, T-1-t) are swapped together so it is in-place.
        def align(i, carry):
            tb = T - 1 - i
            rt = pl.multiple_of(i * BP, BP)
            rb = pl.multiple_of(tb * BP, BP)
            blk_t = gx_ref[pl.ds(rt, BP), :]
            blk_b = gx_ref[pl.ds(rb, BP), :]
            gx_ref[pl.ds(rt, BP), :] = jnp.where(is_fwd_gate, blk_t, blk_b)
            gx_ref[pl.ds(rb, BP), :] = jnp.where(is_fwd_gate, blk_b, blk_t)
            return carry

        lax.fori_loop(0, (T + 1) // 2, align, 0)

        # ---- fused bidirectional recurrence (single serial fori_loop over T) ----
        whh = whh_ref[...]                                 # (2H, 8H) bf16

        def step(t, carry):
            h, c = carry                                   # (BP, 2H) f32 each
            rt = pl.multiple_of(t * BP, BP)
            gates = gx_ref[pl.ds(rt, BP), :] + jnp.dot(
                h.astype(jnp.bfloat16), whh, preferred_element_type=jnp.float32)
            i_a = jax.nn.sigmoid(gates[:, 0 * TWO_H:1 * TWO_H])
            f_a = jax.nn.sigmoid(gates[:, 1 * TWO_H:2 * TWO_H])
            g_a = jnp.tanh(gates[:, 2 * TWO_H:3 * TWO_H])
            o_a = jax.nn.sigmoid(gates[:, 3 * TWO_H:4 * TWO_H])
            c_n = f_a * c + i_a * g_a
            h_n = o_a * jnp.tanh(c_n)
            # packed-sequence masking: fwd lanes update while t < len,
            # bwd lanes update while (T-1-t) < len (i.e. start at t = T-len)
            t_f = t.astype(jnp.float32)
            t_lane = jnp.where(is_fwd_state, t_f, jnp.float32(T - 1) - t_f)
            m = t_lane < lengths                           # (BP, 2H)
            return jnp.where(m, h_n, h), jnp.where(m, c_n, c)

        zeros_state = jnp.zeros((BP, TWO_H), jnp.float32)
        h, _ = lax.fori_loop(0, T, step, (zeros_state, zeros_state))

        # torch: cat([h[-1] (backward dir), h[-2] (forward dir)], dim=1)
        out = jnp.concatenate([h[:, H:], h[:, :H]], axis=1)            # (BP, 2H)
        if OUT_LANES > TWO_H:                              # lane-dense full store
            out = jnp.concatenate(
                [out, jnp.zeros((BP, OUT_LANES - TWO_H), jnp.float32)], axis=1)
        o_ref[...] = out

    return kernel


# ------------------------------- full forward -------------------------------
def text_encoder_forward(token_ids, attention_mask, params):
    B, T = token_ids.shape
    C, H = CHANNELS, HIDDEN
    BP = _round_up(B, 8)   # pad batch rows so every timestep block is sublane-aligned

    lengths = attention_mask.sum(-1).astype(jnp.float32)               # (B,)
    # tiny host-side index plumbing only (no (T*B, C) activation passes in HBM)
    ids_tm = jnp.zeros((T, BP), jnp.int32).at[:, :B].set(token_ids.astype(jnp.int32).T)
    ids_flat = ids_tm.reshape(T * BP, 1)                                # time-major flat
    len2d = jnp.zeros((BP, 1), jnp.float32).at[:B, 0].set(lengths)      # pad rows: len 0

    out_pad = pl.pallas_call(
        _make_encoder_kernel(BP, T, C, H),
        out_shape=jax.ShapeDtypeStruct((BP, OUT_LANES), jnp.float32),
        scratch_shapes=[
            pltpu.VMEM(((T + 2 * PAD) * BP, C), jnp.bfloat16),   # padded conv buffer
            pltpu.VMEM((T * BP, 8 * H), jnp.float32),            # hoisted gate projections
        ],
    )(ids_flat, len2d, params['embedding'], params['cnn_w'],
      params['cnn_scale'], params['cnn_shift'],
      params['wih_big'], params['whh_big'], params['b_big'])
    return out_pad[:B, :2 * H]                                          # (B, C)


# --------------------------- deterministic params ---------------------------
def init_params(key):
    ks = jax.random.split(key, 13)
    C, H, K4 = CHANNELS, HIDDEN, 4 * HIDDEN

    emb = 0.1 * jax.random.normal(ks[0], (N_VOCABS, C), jnp.float32)

    # conv weights sampled directly in im2col layout: w[d, k*C + ci, co]
    cnn_w = jax.random.normal(ks[1], (DEPTH, KERNEL * C, C), jnp.float32) \
        * (1.0 / (C * KERNEL) ** 0.5)
    cnn_b = 0.05 * jax.random.normal(ks[2], (DEPTH, 1, C), jnp.float32)
    gamma = 1.0 + 0.1 * jax.random.normal(ks[3], (DEPTH, 1, C), jnp.float32)
    beta = 0.1 * jax.random.normal(ks[4], (DEPTH, 1, C), jnp.float32)
    r_mean = 0.05 * jax.random.normal(ks[5], (DEPTH, 1, C), jnp.float32)
    r_var = 1.0 + 0.1 * jnp.abs(
        jax.random.normal(ks[6], (DEPTH, 1, C), jnp.float32))
    eps = 1e-5
    scale = gamma / jnp.sqrt(r_var + eps)
    shift = beta + scale * (cnn_b - r_mean)   # BN(eval) with conv bias folded in

    # LSTM params in PyTorch gate order i,f,g,o (b = b_ih + b_hh combined; the
    # 2*uniform init only approximates the sum in distribution — init-only).
    s = 1.0 / (H ** 0.5)

    def u(k, shape):
        return jax.random.uniform(k, shape, jnp.float32, -s, s)

    wih_f = u(ks[7], (C, K4))
    whh_f = u(ks[8], (H, K4))
    b_f = 2.0 * u(ks[9], (1, K4))
    wih_b = u(ks[10], (C, K4))
    whh_b = u(ks[11], (H, K4))
    b_b = 2.0 * u(ks[12], (1, K4))

    # fused two-direction, gate-interleaved layout:
    #   gate lanes = [i_f i_b | f_f f_b | g_f g_b | o_f o_b], 8H = 128 lanes
    def interleave(f, b):
        fs = jnp.split(f, 4, axis=-1)
        bs = jnp.split(b, 4, axis=-1)
        return jnp.concatenate([x for pair in zip(fs, bs) for x in pair], axis=-1)

    wih_big = interleave(wih_f, wih_b)                 # (C, 8H)
    b_big = interleave(b_f, b_b)                       # (1, 8H)

    zhh = jnp.zeros((H, H), jnp.float32)
    blocks = []
    for q in range(4):
        blocks.append(jnp.concatenate([whh_f[:, q * H:(q + 1) * H], zhh], axis=0))
        blocks.append(jnp.concatenate([zhh, whh_b[:, q * H:(q + 1) * H]], axis=0))
    whh_big = jnp.concatenate(blocks, axis=-1)         # (2H, 8H), block structure

    return dict(embedding=emb.astype(jnp.bfloat16),    # MXU operands in bf16
                cnn_w=cnn_w.astype(jnp.bfloat16),
                cnn_scale=scale, cnn_shift=shift,
                wih_big=wih_big.astype(jnp.bfloat16),
                whh_big=whh_big.astype(jnp.bfloat16),
                b_big=b_big)


# ----------------------------------- main -----------------------------------
if __name__ == "__main__":
    key = jax.random.PRNGKey(0)
    pkey, dkey = jax.random.split(key)
    params = init_params(pkey)

    B, T = 2, 8
    token_ids = jax.random.randint(dkey, (B, T), 0, N_VOCABS, dtype=jnp.int32)
    lengths = jnp.array([T, 5], dtype=jnp.int32)
    attention_mask = (jnp.arange(T)[None, :] < lengths[:, None]).astype(jnp.int32)

    out = text_encoder_forward(token_ids, attention_mask, params)
    out = jax.block_until_ready(out)
    assert out.shape == (B, CHANNELS), out.shape
    assert jnp.all(jnp.isfinite(out))
    print("KERNEL_OK")
</pallas_src>

<mosaic_0001>
module attributes {stable_mosaic.version = 11 : i64} {
  func.func @kernel(%arg0: memref<64x1xi32, #tpu.memory_space<vmem>>, %arg1: memref<8x1xf32, #tpu.memory_space<vmem>>, %arg2: memref<50x32xbf16, #tpu.memory_space<vmem>>, %arg3: memref<3x160x32xbf16, #tpu.memory_space<vmem>>, %arg4: memref<3x1x32xf32, #tpu.memory_space<vmem>>, %arg5: memref<3x1x32xf32, #tpu.memory_space<vmem>>, %arg6: memref<32x128xbf16, #tpu.memory_space<vmem>>, %arg7: memref<32x128xbf16, #tpu.memory_space<vmem>>, %arg8: memref<1x128xf32, #tpu.memory_space<vmem>>, %arg9: memref<8x128xf32, #tpu.memory_space<vmem>>, %arg10: memref<96x32xbf16, #tpu.memory_space<vmem>>, %arg11: memref<64x128xf32, #tpu.memory_space<vmem>>) attributes {dimension_semantics = [], scalar_prefetch = 0 : i64, scratch_operands = 2 : i64, tpu.core_type = #tpu.core_type<tc>} {
    %c0 = arith.constant 0 : index
    %c0_0 = arith.constant 0 : index
    %0 = vector.load %arg0[%c0, %c0_0] : memref<64x1xi32, #tpu.memory_space<vmem>>, vector<64x1xi32>
    %1 = tpu.iota {dimensions = array<i32: 1>} : vector<64x50xi32>
    %2 = vector.broadcast %0 : vector<64x1xi32> to vector<64x50xi32>
    %3 = arith.cmpi eq, %2, %1 : vector<64x50xi32>
    %cst = arith.constant 1.000000e+00 : f32
    %cst_1 = arith.constant 0.000000e+00 : f32
    %4 = vector.broadcast %cst : f32 to vector<64x50xf32>
    %5 = vector.broadcast %cst_1 : f32 to vector<64x50xf32>
    %6 = arith.select %3, %4, %5 : vector<64x50xi1>, vector<64x50xf32>
    %7 = arith.truncf %6 : vector<64x50xf32> to vector<64x50xbf16>
    %c0_2 = arith.constant 0 : index
    %c0_3 = arith.constant 0 : index
    %8 = vector.load %arg2[%c0_2, %c0_3] : memref<50x32xbf16, #tpu.memory_space<vmem>>, vector<50x32xbf16>
    %cst_4 = arith.constant dense<0.000000e+00> : vector<64x32xf32>
    %9 = tpu.matmul %7, %8, %cst_4 {dimension_numbers = #tpu.dot_dimension_numbers<[1], [0], [0], [1], [0, 0, 1, 1], [], []>} : vector<64x50xbf16>, vector<50x32xbf16>, vector<64x32xf32> -> vector<64x32xf32>
    %cst_5 = arith.constant 0.000000e+00 : bf16
    %10 = vector.broadcast %cst_5 : bf16 to vector<96x32xbf16>
    %c0_6 = arith.constant 0 : index
    %c0_7 = arith.constant 0 : index
    %11 = vector.load %arg10[%c0_6, %c0_7] : memref<96x32xbf16, #tpu.memory_space<vmem>>, vector<96x32xbf16>
    tpu.vector_store %arg10[%c0_6, %c0_7], %10 {strides = array<i32>} : memref<96x32xbf16, #tpu.memory_space<vmem>>, vector<96x32xbf16>,
    %12 = arith.truncf %9 : vector<64x32xf32> to vector<64x32xbf16>
    %c16 = arith.constant 16 : index
    %c0_8 = arith.constant 0 : index
    %13 = vector.load %arg10[%c16, %c0_8] : memref<96x32xbf16, #tpu.memory_space<vmem>>, vector<64x32xbf16>
    tpu.vector_store %arg10[%c16, %c0_8], %12 {strides = array<i32>} : memref<96x32xbf16, #tpu.memory_space<vmem>>, vector<64x32xbf16>,
    %c0_9 = arith.constant 0 : index
    %c0_10 = arith.constant 0 : index
    %14 = vector.load %arg10[%c0_9, %c0_10] : memref<96x32xbf16, #tpu.memory_space<vmem>>, vector<64x32xbf16>
    %c8 = arith.constant 8 : index
    %c0_11 = arith.constant 0 : index
    %15 = vector.load %arg10[%c8, %c0_11] : memref<96x32xbf16, #tpu.memory_space<vmem>>, vector<64x32xbf16>
    %c16_12 = arith.constant 16 : index
    %c0_13 = arith.constant 0 : index
    %16 = vector.load %arg10[%c16_12, %c0_13] : memref<96x32xbf16, #tpu.memory_space<vmem>>, vector<64x32xbf16>
    %c24 = arith.constant 24 : index
    %c0_14 = arith.constant 0 : index
    %17 = vector.load %arg10[%c24, %c0_14] : memref<96x32xbf16, #tpu.memory_space<vmem>>, vector<64x32xbf16>
    %c32 = arith.constant 32 : index
    %c0_15 = arith.constant 0 : index
    %18 = vector.load %arg10[%c32, %c0_15] : memref<96x32xbf16, #tpu.memory_space<vmem>>, vector<64x32xbf16>
    %19 = tpu.concatenate %14, %15, %16, %17, %18 in 1 : vector<64x32xbf16>, vector<64x32xbf16>, vector<64x32xbf16>, vector<64x32xbf16>, vector<64x32xbf16> -> vector<64x160xbf16>
    %c0_16 = arith.constant 0 : index
    %c0_17 = arith.constant 0 : index
    %c0_18 = arith.constant 0 : index
    %20 = vector.load %arg3[%c0_16, %c0_17, %c0_18] : memref<3x160x32xbf16, #tpu.memory_space<vmem>>, vector<1x160x32xbf16>
    %21 = vector.shape_cast %20 : vector<1x160x32xbf16> to vector<160x32xbf16>
    %cst_19 = arith.constant dense<0.000000e+00> : vector<64x32xf32>
    %22 = tpu.matmul %19, %21, %cst_19 {dimension_numbers = #tpu.dot_dimension_numbers<[1], [0], [0], [1], [0, 0, 1, 1], [], []>} : vector<64x160xbf16>, vector<160x32xbf16>, vector<64x32xf32> -> vector<64x32xf32>
    %c0_20 = arith.constant 0 : index
    %c0_21 = arith.constant 0 : index
    %c0_22 = arith.constant 0 : index
    %23 = vector.load %arg4[%c0_20, %c0_21, %c0_22] : memref<3x1x32xf32, #tpu.memory_space<vmem>>, vector<1x1x32xf32>
    %24 = vector.shape_cast %23 : vector<1x1x32xf32> to vector<1x32xf32>
    %25 = vector.broadcast %24 : vector<1x32xf32> to vector<64x32xf32>
    %26 = arith.mulf %22, %25 : vector<64x32xf32>
    %c0_23 = arith.constant 0 : index
    %c0_24 = arith.constant 0 : index
    %c0_25 = arith.constant 0 : index
    %27 = vector.load %arg5[%c0_23, %c0_24, %c0_25] : memref<3x1x32xf32, #tpu.memory_space<vmem>>, vector<1x1x32xf32>
    %28 = vector.shape_cast %27 : vector<1x1x32xf32> to vector<1x32xf32>
    %29 = vector.broadcast %28 : vector<1x32xf32> to vector<64x32xf32>
    %30 = arith.addf %26, %29 : vector<64x32xf32>
    %cst_26 = arith.constant 0.000000e+00 : f32
    %31 = vector.broadcast %cst_26 : f32 to vector<64x32xf32>
    %32 = arith.maximumf %30, %31 : vector<64x32xf32>
    %33 = arith.truncf %32 : vector<64x32xf32> to vector<64x32xbf16>
    %c16_27 = arith.constant 16 : index
    %c0_28 = arith.constant 0 : index
    %34 = vector.load %arg10[%c16_27, %c0_28] : memref<96x32xbf16, #tpu.memory_space<vmem>>, vector<64x32xbf16>
    tpu.vector_store %arg10[%c16_27, %c0_28], %33 {strides = array<i32>} : memref<96x32xbf16, #tpu.memory_space<vmem>>, vector<64x32xbf16>,
    %c0_29 = arith.constant 0 : index
    %c0_30 = arith.constant 0 : index
    %35 = vector.load %arg10[%c0_29, %c0_30] : memref<96x32xbf16, #tpu.memory_space<vmem>>, vector<64x32xbf16>
    %c8_31 = arith.constant 8 : index
    %c0_32 = arith.constant 0 : index
    %36 = vector.load %arg10[%c8_31, %c0_32] : memref<96x32xbf16, #tpu.memory_space<vmem>>, vector<64x32xbf16>
    %c16_33 = arith.constant 16 : index
    %c0_34 = arith.constant 0 : index
    %37 = vector.load %arg10[%c16_33, %c0_34] : memref<96x32xbf16, #tpu.memory_space<vmem>>, vector<64x32xbf16>
    %c24_35 = arith.constant 24 : index
    %c0_36 = arith.constant 0 : index
    %38 = vector.load %arg10[%c24_35, %c0_36] : memref<96x32xbf16, #tpu.memory_space<vmem>>, vector<64x32xbf16>
    %c32_37 = arith.constant 32 : index
    %c0_38 = arith.constant 0 : index
    %39 = vector.load %arg10[%c32_37, %c0_38] : memref<96x32xbf16, #tpu.memory_space<vmem>>, vector<64x32xbf16>
    %40 = tpu.concatenate %35, %36, %37, %38, %39 in 1 : vector<64x32xbf16>, vector<64x32xbf16>, vector<64x32xbf16>, vector<64x32xbf16>, vector<64x32xbf16> -> vector<64x160xbf16>
    %c1 = arith.constant 1 : index
    %c0_39 = arith.constant 0 : index
    %c0_40 = arith.constant 0 : index
    %41 = vector.load %arg3[%c1, %c0_39, %c0_40] : memref<3x160x32xbf16, #tpu.memory_space<vmem>>, vector<1x160x32xbf16>
    %42 = vector.shape_cast %41 : vector<1x160x32xbf16> to vector<160x32xbf16>
    %cst_41 = arith.constant dense<0.000000e+00> : vector<64x32xf32>
    %43 = tpu.matmul %40, %42, %cst_41 {dimension_numbers = #tpu.dot_dimension_numbers<[1], [0], [0], [1], [0, 0, 1, 1], [], []>} : vector<64x160xbf16>, vector<160x32xbf16>, vector<64x32xf32> -> vector<64x32xf32>
    %c1_42 = arith.constant 1 : index
    %c0_43 = arith.constant 0 : index
    %c0_44 = arith.constant 0 : index
    %44 = vector.load %arg4[%c1_42, %c0_43, %c0_44] : memref<3x1x32xf32, #tpu.memory_space<vmem>>, vector<1x1x32xf32>
    %45 = vector.shape_cast %44 : vector<1x1x32xf32> to vector<1x32xf32>
    %46 = vector.broadcast %45 : vector<1x32xf32> to vector<64x32xf32>
    %47 = arith.mulf %43, %46 : vector<64x32xf32>
    %c1_45 = arith.constant 1 : index
    %c0_46 = arith.constant 0 : index
    %c0_47 = arith.constant 0 : index
    %48 = vector.load %arg5[%c1_45, %c0_46, %c0_47] : memref<3x1x32xf32, #tpu.memory_space<vmem>>, vector<1x1x32xf32>
    %49 = vector.shape_cast %48 : vector<1x1x32xf32> to vector<1x32xf32>
    %50 = vector.broadcast %49 : vector<1x32xf32> to vector<64x32xf32>
    %51 = arith.addf %47, %50 : vector<64x32xf32>
    %cst_48 = arith.constant 0.000000e+00 : f32
    %52 = vector.broadcast %cst_48 : f32 to vector<64x32xf32>
    %53 = arith.maximumf %51, %52 : vector<64x32xf32>
    %54 = arith.truncf %53 : vector<64x32xf32> to vector<64x32xbf16>
    %c16_49 = arith.constant 16 : index
    %c0_50 = arith.constant 0 : index
    %55 = vector.load %arg10[%c16_49, %c0_50] : memref<96x32xbf16, #tpu.memory_space<vmem>>, vector<64x32xbf16>
    tpu.vector_store %arg10[%c16_49, %c0_50], %54 {strides = array<i32>} : memref<96x32xbf16, #tpu.memory_space<vmem>>, vector<64x32xbf16>,
    %c0_51 = arith.constant 0 : index
    %c0_52 = arith.constant 0 : index
    %56 = vector.load %arg10[%c0_51, %c0_52] : memref<96x32xbf16, #tpu.memory_space<vmem>>, vector<64x32xbf16>
    %c8_53 = arith.constant 8 : index
    %c0_54 = arith.constant 0 : index
    %57 = vector.load %arg10[%c8_53, %c0_54] : memref<96x32xbf16, #tpu.memory_space<vmem>>, vector<64x32xbf16>
    %c16_55 = arith.constant 16 : index
    %c0_56 = arith.constant 0 : index
    %58 = vector.load %arg10[%c16_55, %c0_56] : memref<96x32xbf16, #tpu.memory_space<vmem>>, vector<64x32xbf16>
    %c24_57 = arith.constant 24 : index
    %c0_58 = arith.constant 0 : index
    %59 = vector.load %arg10[%c24_57, %c0_58] : memref<96x32xbf16, #tpu.memory_space<vmem>>, vector<64x32xbf16>
    %c32_59 = arith.constant 32 : index
    %c0_60 = arith.constant 0 : index
    %60 = vector.load %arg10[%c32_59, %c0_60] : memref<96x32xbf16, #tpu.memory_space<vmem>>, vector<64x32xbf16>
    %61 = tpu.concatenate %56, %57, %58, %59, %60 in 1 : vector<64x32xbf16>, vector<64x32xbf16>, vector<64x32xbf16>, vector<64x32xbf16>, vector<64x32xbf16> -> vector<64x160xbf16>
    %c2 = arith.constant 2 : index
    %c0_61 = arith.constant 0 : index
    %c0_62 = arith.constant 0 : index
    %62 = vector.load %arg3[%c2, %c0_61, %c0_62] : memref<3x160x32xbf16, #tpu.memory_space<vmem>>, vector<1x160x32xbf16>
    %63 = vector.shape_cast %62 : vector<1x160x32xbf16> to vector<160x32xbf16>
    %cst_63 = arith.constant dense<0.000000e+00> : vector<64x32xf32>
    %64 = tpu.matmul %61, %63, %cst_63 {dimension_numbers = #tpu.dot_dimension_numbers<[1], [0], [0], [1], [0, 0, 1, 1], [], []>} : vector<64x160xbf16>, vector<160x32xbf16>, vector<64x32xf32> -> vector<64x32xf32>
    %c2_64 = arith.constant 2 : index
    %c0_65 = arith.constant 0 : index
    %c0_66 = arith.constant 0 : index
    %65 = vector.load %arg4[%c2_64, %c0_65, %c0_66] : memref<3x1x32xf32, #tpu.memory_space<vmem>>, vector<1x1x32xf32>
    %66 = vector.shape_cast %65 : vector<1x1x32xf32> to vector<1x32xf32>
    %67 = vector.broadcast %66 : vector<1x32xf32> to vector<64x32xf32>
    %68 = arith.mulf %64, %67 : vector<64x32xf32>
    %c2_67 = arith.constant 2 : index
    %c0_68 = arith.constant 0 : index
    %c0_69 = arith.constant 0 : index
    %69 = vector.load %arg5[%c2_67, %c0_68, %c0_69] : memref<3x1x32xf32, #tpu.memory_space<vmem>>, vector<1x1x32xf32>
    %70 = vector.shape_cast %69 : vector<1x1x32xf32> to vector<1x32xf32>
    %71 = vector.broadcast %70 : vector<1x32xf32> to vector<64x32xf32>
    %72 = arith.addf %68, %71 : vector<64x32xf32>
    %cst_70 = arith.constant 0.000000e+00 : f32
    %73 = vector.broadcast %cst_70 : f32 to vector<64x32xf32>
    %74 = arith.maximumf %72, %73 : vector<64x32xf32>
    %75 = arith.truncf %74 : vector<64x32xf32> to vector<64x32xbf16>
    %c0_71 = arith.constant 0 : index
    %c0_72 = arith.constant 0 : index
    %76 = vector.load %arg6[%c0_71, %c0_72] : memref<32x128xbf16, #tpu.memory_space<vmem>>, vector<32x128xbf16>
    %cst_73 = arith.constant dense<0.000000e+00> : vector<64x128xf32>
    %77 = tpu.matmul %75, %76, %cst_73 {dimension_numbers = #tpu.dot_dimension_numbers<[1], [0], [0], [1], [0, 0, 1, 1], [], []>} : vector<64x32xbf16>, vector<32x128xbf16>, vector<64x128xf32> -> vector<64x128xf32>
    %c0_74 = arith.constant 0 : index
    %c0_75 = arith.constant 0 : index
    %78 = vector.load %arg8[%c0_74, %c0_75] : memref<1x128xf32, #tpu.memory_space<vmem>>, vector<1x128xf32>
    %79 = vector.broadcast %78 : vector<1x128xf32> to vector<64x128xf32>
    %80 = arith.addf %77, %79 : vector<64x128xf32>
    %c0_76 = arith.constant 0 : index
    %c0_77 = arith.constant 0 : index
    %81 = vector.load %arg11[%c0_76, %c0_77] : memref<64x128xf32, #tpu.memory_space<vmem>>, vector<64x128xf32>
    tpu.vector_store %arg11[%c0_76, %c0_77], %80 {strides = array<i32>} : memref<64x128xf32, #tpu.memory_space<vmem>>, vector<64x128xf32>,
    %82 = tpu.iota {dimensions = array<i32: 1>} : vector<8x128xi32>
    %c32_i32 = arith.constant 32 : i32
    %c0_i32 = arith.constant 0 : i32
    %83 = arith.cmpi eq, %c32_i32, %c0_i32 : i32
    %c1_i32 = arith.constant 1 : i32
    %84 = arith.select %83, %c1_i32, %c32_i32 : i32
    %85 = vector.broadcast %84 : i32 to vector<8x128xi32>
    %86 = arith.remsi %82, %85 : vector<8x128xi32>
    %c0_i32_78 = arith.constant 0 : i32
    %87 = vector.broadcast %c0_i32_78 : i32 to vector<8x128xi32>
    %88 = arith.cmpi ne, %86, %87 : vector<8x128xi32>
    %c0_i32_79 = arith.constant 0 : i32
    %89 = vector.broadcast %c0_i32_79 : i32 to vector<8x128xi32>
    %90 = arith.cmpi slt, %86, %89 : vector<8x128xi32>
    %c0_i32_80 = arith.constant 0 : i32
    %91 = arith.cmpi slt, %84, %c0_i32_80 : i32
    %92 = vector.broadcast %91 : i1 to vector<8x128xi1>
    %93 = vector.broadcast %92 : vector<8x128xi1> to vector<8x128xi1>
    %94 = arith.xori %90, %93 : vector<8x128xi1>
    %95 = arith.andi %94, %88 : vector<8x128xi1>
    %96 = vector.broadcast %84 : i32 to vector<8x128xi32>
    %97 = arith.addi %86, %96 : vector<8x128xi32>
    %98 = arith.select %95, %97, %86 : vector<8x128xi1>, vector<8x128xi32>
    %c16_i32 = arith.constant 16 : i32
    %99 = vector.broadcast %c16_i32 : i32 to vector<8x128xi32>
    %100 = arith.cmpi slt, %98, %99 : vector<8x128xi32>
    %101 = tpu.iota {dimensions = array<i32: 1>} : vector<8x32xi32>
    %c16_i32_81 = arith.constant 16 : i32
    %102 = vector.broadcast %c16_i32_81 : i32 to vector<8x32xi32>
    %103 = arith.cmpi slt, %101, %102 : vector<8x32xi32>
    %c0_82 = arith.constant 0 : index
    %c0_83 = arith.constant 0 : index
    %104 = vector.load %arg1[%c0_82, %c0_83] : memref<8x1xf32, #tpu.memory_space<vmem>>, vector<8x1xf32>
    %c0_i32_84 = arith.constant 0 : i32
    %c4_i32 = arith.constant 4 : i32
    %105 = arith.addi %c0_i32_84, %c4_i32 : i32
    %c1_i32_85 = arith.constant 1 : i32
    scf.for %arg12 = %c0_i32_84 to %105 step %c1_i32_85  : i32 {
      %c7_i32 = arith.constant 7 : i32
      %116 = arith.subi %c7_i32, %arg12 : i32
      %c8_i32_96 = arith.constant 8 : i32
      %117 = arith.muli %arg12, %c8_i32_96 : i32
      %118 = tpu.assume_multiple %117, 8 : i32
      %c8_i32_97 = arith.constant 8 : i32
      %119 = arith.muli %116, %c8_i32_97 : i32
      %120 = tpu.assume_multiple %119, 8 : i32
      %121 = arith.index_cast %118 : i32 to index
      %c0_98 = arith.constant 0 : index
      %122 = vector.load %arg11[%121, %c0_98] : memref<64x128xf32, #tpu.memory_space<vmem>>, vector<8x128xf32>
      %123 = arith.index_cast %120 : i32 to index
      %c0_99 = arith.constant 0 : index
      %124 = vector.load %arg11[%123, %c0_99] : memref<64x128xf32, #tpu.memory_space<vmem>>, vector<8x128xf32>
      %125 = arith.select %100, %122, %124 : vector<8x128xi1>, vector<8x128xf32>
      %126 = arith.index_cast %118 : i32 to index
      %c0_100 = arith.constant 0 : index
      %127 = vector.load %arg11[%126, %c0_100] : memref<64x128xf32, #tpu.memory_space<vmem>>, vector<8x128xf32>
      tpu.vector_store %arg11[%126, %c0_100], %125 {strides = array<i32>} : memref<64x128xf32, #tpu.memory_space<vmem>>, vector<8x128xf32>,
      %128 = arith.select %100, %124, %122 : vector<8x128xi1>, vector<8x128xf32>
      %129 = arith.index_cast %120 : i32 to index
      %c0_101 = arith.constant 0 : index
      %130 = vector.load %arg11[%129, %c0_101] : memref<64x128xf32, #tpu.memory_space<vmem>>, vector<8x128xf32>
      tpu.vector_store %arg11[%129, %c0_101], %128 {strides = array<i32>} : memref<64x128xf32, #tpu.memory_space<vmem>>, vector<8x128xf32>,
    }
    %c4_i32_86 = arith.constant 4 : i32
    %c0_87 = arith.constant 0 : index
    %c0_88 = arith.constant 0 : index
    %106 = vector.load %arg7[%c0_87, %c0_88] : memref<32x128xbf16, #tpu.memory_space<vmem>>, vector<32x128xbf16>
    %cst_89 = arith.constant 0.000000e+00 : f32
    %107 = vector.broadcast %cst_89 : f32 to vector<8x32xf32>
    %c0_i32_90 = arith.constant 0 : i32
    %c8_i32 = arith.constant 8 : i32
    %108 = arith.addi %c0_i32_90, %c8_i32 : i32
    %c1_i32_91 = arith.constant 1 : i32
    %109:2 = scf.for %arg12 = %c0_i32_90 to %108 step %c1_i32_91 iter_args(%arg13 = %107, %arg14 = %107) -> (vector<8x32xf32>, vector<8x32xf32>)  : i32 {
      %c8_i32_96 = arith.constant 8 : i32
      %116 = arith.muli %arg12, %c8_i32_96 : i32
      %117 = tpu.assume_multiple %116, 8 : i32
      %118 = arith.index_cast %117 : i32 to index
      %c0_97 = arith.constant 0 : index
      %119 = vector.load %arg11[%118, %c0_97] : memref<64x128xf32, #tpu.memory_space<vmem>>, vector<8x128xf32>
      %120 = arith.truncf %arg13 : vector<8x32xf32> to vector<8x32xbf16>
      %cst_98 = arith.constant dense<0.000000e+00> : vector<8x128xf32>
      %121 = tpu.matmul %120, %106, %cst_98 {dimension_numbers = #tpu.dot_dimension_numbers<[1], [0], [0], [1], [0, 0, 1, 1], [], []>} : vector<8x32xbf16>, vector<32x128xbf16>, vector<8x128xf32> -> vector<8x128xf32>
      %122 = arith.addf %119, %121 : vector<8x128xf32>
      %123 = vector.extract_strided_slice %122 {offsets = [0, 0], sizes = [8, 32], strides = [1, 1]} : vector<8x128xf32> to vector<8x32xf32>
      %124 = arith.negf %123 : vector<8x32xf32>
      %125 = math.exp %124 : vector<8x32xf32>
      %cst_99 = arith.constant 1.000000e+00 : f32
      %126 = vector.broadcast %cst_99 : f32 to vector<8x32xf32>
      %127 = arith.addf %126, %125 : vector<8x32xf32>
      %128 = arith.divf %126, %127 : vector<8x32xf32>
      %129 = vector.extract_strided_slice %122 {offsets = [0, 32], sizes = [8, 32], strides = [1, 1]} : vector<8x128xf32> to vector<8x32xf32>
      %130 = arith.negf %129 : vector<8x32xf32>
      %131 = math.exp %130 : vector<8x32xf32>
      %cst_100 = arith.constant 1.000000e+00 : f32
      %132 = vector.broadcast %cst_100 : f32 to vector<8x32xf32>
      %133 = arith.addf %132, %131 : vector<8x32xf32>
      %134 = arith.divf %132, %133 : vector<8x32xf32>
      %135 = vector.extract_strided_slice %122 {offsets = [0, 64], sizes = [8, 32], strides = [1, 1]} : vector<8x128xf32> to vector<8x32xf32>
      %136 = math.tanh %135 : vector<8x32xf32>
      %137 = vector.extract_strided_slice %122 {offsets = [0, 96], sizes = [8, 32], strides = [1, 1]} : vector<8x128xf32> to vector<8x32xf32>
      %138 = arith.negf %137 : vector<8x32xf32>
      %139 = math.exp %138 : vector<8x32xf32>
      %cst_101 = arith.constant 1.000000e+00 : f32
      %140 = vector.broadcast %cst_101 : f32 to vector<8x32xf32>
      %141 = arith.addf %140, %139 : vector<8x32xf32>
      %142 = arith.divf %140, %141 : vector<8x32xf32>
      %143 = arith.mulf %134, %arg14 : vector<8x32xf32>
      %144 = arith.mulf %128, %136 : vector<8x32xf32>
      %145 = arith.addf %143, %144 : vector<8x32xf32>
      %146 = math.tanh %145 : vector<8x32xf32>
      %147 = arith.mulf %142, %146 : vector<8x32xf32>
      %148 = arith.sitofp %arg12 : i32 to f32
      %cst_102 = arith.constant 7.000000e+00 : f32
      %149 = arith.subf %cst_102, %148 : f32
      %150 = vector.broadcast %148 : f32 to vector<8x32xf32>
      %151 = vector.broadcast %149 : f32 to vector<8x32xf32>
      %152 = arith.select %103, %150, %151 : vector<8x32xi1>, vector<8x32xf32>
      %153 = vector.broadcast %104 : vector<8x1xf32> to vector<8x32xf32>
      %154 = arith.cmpf olt, %152, %153 : vector<8x32xf32>
      %155 = arith.select %154, %147, %arg13 : vector<8x32xi1>, vector<8x32xf32>
      %156 = arith.select %154, %145, %arg14 : vector<8x32xi1>, vector<8x32xf32>
      scf.yield %155, %156 : vector<8x32xf32>, vector<8x32xf32>
    }
    %c8_i32_92 = arith.constant 8 : i32
    %110 = vector.extract_strided_slice %109#0 {offsets = [0, 16], sizes = [8, 16], strides = [1, 1]} : vector<8x32xf32> to vector<8x16xf32>
    %111 = vector.extract_strided_slice %109#0 {offsets = [0, 0], sizes = [8, 16], strides = [1, 1]} : vector<8x32xf32> to vector<8x16xf32>
    %112 = tpu.concatenate %110, %111 in 1 : vector<8x16xf32>, vector<8x16xf32> -> vector<8x32xf32>
    %cst_93 = arith.constant 0.000000e+00 : f32
    %113 = vector.broadcast %cst_93 : f32 to vector<8x96xf32>
    %114 = tpu.concatenate %112, %113 in 1 : vector<8x32xf32>, vector<8x96xf32> -> vector<8x128xf32>
    %c0_94 = arith.constant 0 : index
    %c0_95 = arith.constant 0 : index
    %115 = vector.load %arg9[%c0_94, %c0_95] : memref<8x128xf32, #tpu.memory_space<vmem>>, vector<8x128xf32>
    tpu.vector_store %arg9[%c0_94, %c0_95], %114 {strides = array<i32>} : memref<8x128xf32, #tpu.memory_space<vmem>>, vector<8x128xf32>,
    return
  }
}

</mosaic_0001>

<llo_original>
// kernel: tpu_custom_call.1
$region0: #{tpu_custom_call.1}
  #allocation0 [shape = 'u32[]', space=smem, size = 0x4, offset = 0x4, fixed_abs, tag = 'smem constant byte address 0x4 - core index']
  #allocation1 [shape = 'u32[144,128]{1,0:T(1,128)}', space=vmem, size = 0x12000, scoped, tag = 'internal scratch']
  #allocation2 [shape = 'bf16[96,32]{1,0:T(16,128)(2,1)}', space=vmem, size = 0x6000, scoped, tag = 'scratch operand']
  #allocation3 [shape = 'f32[64,128]{1,0:T(8,128)}', space=vmem, size = 0x8000, scoped, tag = 'scratch operand']
  %s0 = inlined_call_operand.vmem [shape: s32[64,1], index: 0, kind: input, shape index: {}]
  %s1 = inlined_call_operand.vmem [shape: f32[8,1], index: 1, kind: input, shape index: {}]
  %s2 = inlined_call_operand.vmem [shape: bf16[50,32], index: 2, kind: input, shape index: {}]
  %s3 = inlined_call_operand.vmem [shape: bf16[3,160,32], index: 3, kind: input, shape index: {}]
  %s4 = inlined_call_operand.vmem [shape: f32[3,1,32], index: 4, kind: input, shape index: {}]
  %s5 = inlined_call_operand.vmem [shape: f32[3,1,32], index: 5, kind: input, shape index: {}]
  %s6 = inlined_call_operand.vmem [shape: bf16[32,128], index: 6, kind: input, shape index: {}]
  %s7 = inlined_call_operand.vmem [shape: bf16[32,128], index: 7, kind: input, shape index: {}]
  %s8 = inlined_call_operand.vmem [shape: f32[1,128], index: 8, kind: input, shape index: {}]
  %s9 = inlined_call_operand.hbm [shape: f32[8,128], index: 9, kind: output, shape index: {}]
  %s10 = sld [smem:[#allocation0]]
  $region60: #{tpu_custom_call.1} parent=0
    _
  %s12 = ssub.s32 1, %s10
  %s13 = scalar_select 0, %s12, %s10
  $region1: #{tpu_custom_call.1} parent=0
    #allocation4 [shape = 'u8[4096]{0}', space=vmem, size = 0x1000, scoped, tag = 'output window, operand 0, single buffered']
    #allocation5 [shape = 's32[1]{0}', space=sflag, size = 0x4, scoped, tag = 'scoped memory for tpu_custom_call.1']
    %14 = vsyncpa [#allocation5], 0
    // Predicated region
    $region2: #{tpu_custom_call.1} parent=1 // pred_check
      _
    $region3: #{tpu_custom_call.1} parent=1 // pred_check_branch
      %16 = sbr.rel (0) target = $region5
    $region4: #{tpu_custom_call.1} parent=1 // pred_region
      _
    $region5: #{tpu_custom_call.1} parent=1 // pred_fallthru
      _
    // Predicated region
    $region6: #{tpu_custom_call.1} parent=1 // pred_check
      _
    $region7: #{tpu_custom_call.1} parent=1 // pred_check_branch
      %18 = sbr.rel (0) target = $region9
    $region8: #{tpu_custom_call.1} parent=1 // pred_region
      _
    $region9: #{tpu_custom_call.1} parent=1 // pred_fallthru
      _
    // Predicated region
    $region10: #{tpu_custom_call.1} parent=1 // pred_check
      _
    $region11: #{tpu_custom_call.1} parent=1 // pred_check_branch
      %20 = sbr.rel (0) target = $region13
    $region12: #{tpu_custom_call.1} parent=1 // pred_region
      _
    $region13: #{tpu_custom_call.1} parent=1 // pred_fallthru
      _
    // Predicated region
    $region14: #{tpu_custom_call.1} parent=1 // pred_check
      _
    $region15: #{tpu_custom_call.1} parent=1 // pred_check_branch
      %22 = sbr.rel (0) target = $region17
    $region16: #{tpu_custom_call.1} parent=1 // pred_region
      _
    $region17: #{tpu_custom_call.1} parent=1 // pred_fallthru
      _
    // Predicated region
    $region18: #{tpu_custom_call.1} parent=1 // pred_check
      _
    $region19: #{tpu_custom_call.1} parent=1 // pred_check_branch
      %24 = sbr.rel (0) target = $region21
    $region20: #{tpu_custom_call.1} parent=1 // pred_region
      _
    $region21: #{tpu_custom_call.1} parent=1 // pred_fallthru
      _
    // Predicated region
    $region22: #{tpu_custom_call.1} parent=1 // pred_check
      _
    $region23: #{tpu_custom_call.1} parent=1 // pred_check_branch
      %26 = sbr.rel (0) target = $region25
    $region24: #{tpu_custom_call.1} parent=1 // pred_region
      _
    $region25: #{tpu_custom_call.1} parent=1 // pred_fallthru
      _
    // Predicated region
    $region26: #{tpu_custom_call.1} parent=1 // pred_check
      _
    $region27: #{tpu_custom_call.1} parent=1 // pred_check_branch
      %28 = sbr.rel (0) target = $region29
    $region28: #{tpu_custom_call.1} parent=1 // pred_region
      _
    $region29: #{tpu_custom_call.1} parent=1 // pred_fallthru
      _
    // Predicated region
    $region30: #{tpu_custom_call.1} parent=1 // pred_check
      _
    $region31: #{tpu_custom_call.1} parent=1 // pred_check_branch
      %30 = sbr.rel (0) target = $region33
    $region32: #{tpu_custom_call.1} parent=1 // pred_region
      _
    $region33: #{tpu_custom_call.1} parent=1 // pred_fallthru
      _
    // Predicated region
    $region34: #{tpu_custom_call.1} parent=1 // pred_check
      _
    $region35: #{tpu_custom_call.1} parent=1 // pred_check_branch
      %32 = sbr.rel (0) target = $region37
    $region36: #{tpu_custom_call.1} parent=1 // pred_region
      _
    $region37: #{tpu_custom_call.1} parent=1 // pred_fallthru
      _
    %v34 = vld [vmem:[%s0] sm:$0xff]
    %v35 = vld [vmem:[%s0 + $0x8] sm:$0xff]
    %v36 = vld [vmem:[%s0 + $0x10] sm:$0xff]
    %v37 = vld [vmem:[%s0 + $0x18] sm:$0xff]
    %v38 = vld [vmem:[%s0 + $0x20] sm:$0xff]
    %v39 = vld [vmem:[%s0 + $0x28] sm:$0xff]
    %v40 = vld [vmem:[%s0 + $0x30] sm:$0xff]
    %v41 = vld [vmem:[%s0 + $0x38] sm:$0xff]
    %v42 = vlaneseq
    %v43 = vand.u32 %v42, 127
    %44 = vset.pattern.permute.xlu0 0
    %45 = vperm.xlu0 %44, %v34
    %v46 = vpop.permute.xlu0 %45
    %47 = vset.pattern.permute.xlu0 0
    %48 = vperm.xlu0 %47, %v35
    %v49 = vpop.permute.xlu0 %48
    %50 = vset.pattern.permute.xlu0 0
    %51 = vperm.xlu0 %50, %v36
    %v52 = vpop.permute.xlu0 %51
    %53 = vset.pattern.permute.xlu0 0
    %54 = vperm.xlu0 %53, %v37
    %v55 = vpop.permute.xlu0 %54
    %56 = vset.pattern.permute.xlu0 0
    %57 = vperm.xlu0 %56, %v38
    %v58 = vpop.permute.xlu0 %57
    %59 = vset.pattern.permute.xlu0 0
    %60 = vperm.xlu0 %59, %v39
    %v61 = vpop.permute.xlu0 %60
    %62 = vset.pattern.permute.xlu0 0
    %63 = vperm.xlu0 %62, %v40
    %v64 = vpop.permute.xlu0 %63
    %65 = vset.pattern.permute.xlu0 0
    %66 = vperm.xlu0 %65, %v41
    %v67 = vpop.permute.xlu0 %66
    %vm68 = vcmp.eq.s32.totalorder %v46, %v43
    %vm69 = vcmp.eq.s32.totalorder %v49, %v43
    %vm70 = vcmp.eq.s32.totalorder %v52, %v43
    %vm71 = vcmp.eq.s32.totalorder %v55, %v43
    %vm72 = vcmp.eq.s32.totalorder %v58, %v43
    %vm73 = vcmp.eq.s32.totalorder %v61, %v43
    %vm74 = vcmp.eq.s32.totalorder %v64, %v43
    %vm75 = vcmp.eq.s32.totalorder %v67, %v43
    %v76 = vsel %vm68, 1.0, 0.0
    %v77 = vsel %vm69, 1.0, 0.0
    %v78 = vsel %vm70, 1.0, 0.0
    %v79 = vsel %vm71, 1.0, 0.0
    %v80 = vsel %vm72, 1.0, 0.0
    %v81 = vsel %vm73, 1.0, 0.0
    %v82 = vsel %vm74, 1.0, 0.0
    %v83 = vsel %vm75, 1.0, 0.0
    %v84 = vpack.c.bf16 %v77, %v76
    %v85 = vpack.c.bf16 %v79, %v78
    %v86 = vpack.c.bf16 %v81, %v80
    %v87 = vpack.c.bf16 %v83, %v82
    %v88 = vld [vmem:[%s2] sm:$0xf]
    %v89 = vld [vmem:[%s2 + $0x4] sm:$0xf]
    %v90 = vld [vmem:[%s2 + $0x8] sm:$0xf]
    %v91 = vld [vmem:[%s2 + $0xc] sm:$0xf]
    %v92 = vld [vmem:[%s2 + $0x10] sm:$0xf]
    %v93 = vld [vmem:[%s2 + $0x14] sm:$0xf]
    %v94 = vld [vmem:[%s2 + $0x18] sm:$0x1]
    %v102 = vunpack.c.l.b16 %v88
    %v103 = vunpack.c.l.b16 %v89
    %v104 = vunpack.c.l.b16 %v90
    %v105 = vunpack.c.l.b16 %v91
    %v106 = vunpack.c.l.b16 %v92
    %v107 = vunpack.c.l.b16 %v93
    %v108 = vunpack.c.l.b16 %v94
    %v109 = vpack.c.b16 %v103, %v102
    %v110 = vpack.c.b16 %v105, %v104
    %v111 = vpack.c.b16 %v107, %v106
    %v112 = vpack.c.b16 %v108, %v108
    %vm116 = vcmask 408576
    %v118 = vsel %vm116, %v84, 0
    %v121 = vsel %vm116, %v85, 0
    %v124 = vsel %vm116, %v86, 0
    %v127 = vsel %vm116, %v87, 0
    %vm129 = vcmask 1040384
    %v131 = vsel %vm129, %v112, 0
    %133 = vmatprep.subr.bf16.mxu0 0
    %134 = vmatpush1.bf16.msra.mxu0 %v109
    %135 = vmatprep.subr.bf16.mxu0 0
    %136 = vmatpush1.bf16.msra.mxu0 %v110
    %137 = vmatprep.subr.bf16.mxu0 0
    %138 = vmatpush1.bf16.msra.mxu0 %v111
    %139 = vmatprep.subr.bf16.mxu0 0
    %140 = vmatpush1.bf16.msra.mxu0 %v131
    %141 = vmatprep.subr.bf16.mxu0 0
    %142 = vmatpush1.bf16.msra.mxu0 0
    %143 = vmatprep.subr.bf16.mxu0 0
    %144 = vmatpush1.bf16.msra.mxu0 0
    %145 = vmatprep.subr.bf16.mxu0 0
    %146 = vmatpush1.bf16.msra.mxu0 0
    %147 = vmatprep.subr.bf16.mxu0 0
    %148 = vmatpush1.bf16.msra.mxu0 0
    %149 = vmatprep.subr.bf16.mxu0 0
    %150 = vmatpush1.bf16.msra.mxu0 0
    %151 = vmatprep.subr.bf16.mxu0 0
    %152 = vmatpush1.bf16.msra.mxu0 0
    %153 = vmatprep.subr.bf16.mxu0 0
    %154 = vmatpush1.bf16.msra.mxu0 0
    %155 = vmatprep.subr.bf16.mxu0 0
    %156 = vmatpush1.bf16.msra.mxu0 0
    %157 = vmatprep.subr.bf16.mxu0 0
    %158 = vmatpush1.bf16.msra.mxu0 0
    %159 = vmatprep.subr.bf16.mxu0 0
    %160 = vmatpush1.bf16.msra.mxu0 0
    %161 = vmatprep.subr.bf16.mxu0 0
    %162 = vmatpush1.bf16.msra.mxu0 0
    %163 = vmatprep.subr.bf16.mxu0 0
    %164 = vmatpush1.bf16.msra.mxu0 0
    %165 = vmatprep.mubr.bf16.mxu0 0
    %166 = vmatmul.mubr.bf16.gmra.mrb[0].mxu0 %v118
    %v167 = vpop.f32.mrb[0].mxu0
    %v168 = vadd.f32 0.0, %v167
    %v169 = vpop.f32.mrb[0].mxu0
    %v170 = vpop.f32.mrb[0].mxu0
    %v171 = vadd.f32 0.0, %v170
    %v172 = vpop.f32.mrb[0].mxu0
    %173 = vmatprep.mubr.bf16.mxu0 0
    %174 = vmatmul.mubr.bf16.gmra.mrb[0].mxu0 %v121
    %v175 = vpop.f32.mrb[0].mxu0
    %v176 = vadd.f32 0.0, %v175
    %v177 = vpop.f32.mrb[0].mxu0
    %v178 = vpop.f32.mrb[0].mxu0
    %v179 = vadd.f32 0.0, %v178
    %v180 = vpop.f32.mrb[0].mxu0
    %181 = vmatprep.mubr.bf16.mxu0 0
    %182 = vmatmul.mubr.bf16.gmra.mrb[0].mxu0 %v124
    %v183 = vpop.f32.mrb[0].mxu0
    %v184 = vadd.f32 0.0, %v183
    %v185 = vpop.f32.mrb[0].mxu0
    %v186 = vpop.f32.mrb[0].mxu0
    %v187 = vadd.f32 0.0, %v186
    %v188 = vpop.f32.mrb[0].mxu0
    %189 = vmatprep.mubr.bf16.mxu0 0
    %190 = vmatmul.mubr.bf16.gmra.mrb[0].mxu0 %v127
    %v191 = vpop.f32.mrb[0].mxu0
    %v192 = vadd.f32 0.0, %v191
    %v193 = vpop.f32.mrb[0].mxu0
    %v194 = vpop.f32.mrb[0].mxu0
    %v195 = vadd.f32 0.0, %v194
    %v196 = vpop.f32.mrb[0].mxu0
    %197 = vdwg.mxu0
    %vm198 = vcmask 261120
    %199 = vst.msk [vmem:[#allocation2] sm:$0xff] %vm198, 0
    %200 = vst.msk [vmem:[#allocation2 + $0x8] sm:$0xff] %vm198, 0
    %201 = vst.msk [vmem:[#allocation2 + $0x10] sm:$0xff] %vm198, 0
    %202 = vst.msk [vmem:[#allocation2 + $0x18] sm:$0xff] %vm198, 0
    %203 = vst.msk [vmem:[#allocation2 + $0x20] sm:$0xff] %vm198, 0
    %204 = vst.msk [vmem:[#allocation2 + $0x28] sm:$0xff] %vm198, 0
    %v205 = vpack.c.bf16 %v171, %v168
    %v206 = vpack.c.bf16 %v179, %v176
    %v207 = vpack.c.bf16 %v187, %v184
    %v208 = vpack.c.bf16 %v195, %v192
    %209 = vst.msk [vmem:[#allocation2 + $0x8] sm:$0xff] %vm198, %v205
    %210 = vst.msk [vmem:[#allocation2 + $0x10] sm:$0xff] %vm198, %v206
    %211 = vst.msk [vmem:[#allocation2 + $0x18] sm:$0xff] %vm198, %v207
    %212 = vst.msk [vmem:[#allocation2 + $0x20] sm:$0xff] %vm198, %v208
    %v213 = vld [vmem:[#allocation2] sm:$0xff]
    %v214 = vld [vmem:[#allocation2 + $0x8] sm:$0xff]
    %v215 = vld [vmem:[#allocation2 + $0x10] sm:$0xff]
    %v216 = vld [vmem:[#allocation2 + $0x18] sm:$0xff]
    %v217 = vld [vmem:[#allocation2] sm:$0xf0]
    %v218 = vld [vmem:[#allocation2 + $0x20] sm:$0xf]
    %v219 = vld [vmem:[#allocation2 + $0x20] sm:$0xff]
    %v220 = vld [vmem:[#allocation2 + $0x8] sm:$0xf0]
    %v221 = vld [vmem:[#allocation2 + $0x28] sm:$0xf]
    %v222 = vld [vmem:[#allocation2 + $0x28] sm:$0xff]
    %vm228 = vcmask 1043456
    %v229 = vrot.slane %v217, 4
    %v230 = vrot.slane %v214, 4
    %v231 = vsel %vm228, %v229, %v230
    %v232 = vrot.slane %v215, 4
    %v233 = vsel %vm228, %v230, %v232
    %v234 = vrot.slane %v216, 4
    %v235 = vsel %vm228, %v232, %v234
    %v236 = vrot.slane %v218, 4
    %v237 = vsel %vm228, %v234, %v236
    %238 = vrot.lane.b32.xlu0 %v231, 32
    %v239 = vpop.permute.xlu0 %238
    %240 = vrot.lane.b32.xlu0 %v233, 32
    %v241 = vpop.permute.xlu0 %240
    %242 = vrot.lane.b32.xlu0 %v235, 32
    %v243 = vpop.permute.xlu0 %242
    %244 = vrot.lane.b32.xlu0 %v237, 32
    %v245 = vpop.permute.xlu0 %244
    %247 = vrot.lane.b32.xlu0 %v214, 64
    %v248 = vpop.permute.xlu0 %247
    %249 = vrot.lane.b32.xlu0 %v215, 64
    %v250 = vpop.permute.xlu0 %249
    %251 = vrot.lane.b32.xlu0 %v216, 64
    %v252 = vpop.permute.xlu0 %251
    %253 = vrot.lane.b32.xlu0 %v219, 64
    %v254 = vpop.permute.xlu0 %253
    %v257 = vrot.slane %v220, 4
    %v258 = vsel %vm228, %v257, %v232
    %v259 = vrot.slane %v219, 4
    %v260 = vsel %vm228, %v234, %v259
    %v261 = vrot.slane %v221, 4
    %v262 = vsel %vm228, %v259, %v261
    %263 = vrot.lane.b32.xlu0 %v258, 96
    %v264 = vpop.permute.xlu0 %263
    %265 = vrot.lane.b32.xlu0 %v235, 96
    %v266 = vpop.permute.xlu0 %265
    %267 = vrot.lane.b32.xlu0 %v260, 96
    %v268 = vpop.permute.xlu0 %267
    %269 = vrot.lane.b32.xlu0 %v262, 96
    %v270 = vpop.permute.xlu0 %269
    %v273 = vsel %vm198, %v213, %v239
    %v276 = vsel %vm198, %v214, %v241
    %v279 = vsel %vm198, %v215, %v243
    %v282 = vsel %vm198, %v216, %v245
    %vm283 = vcmask 523264
    %v285 = vsel %vm283, %v273, %v248
    %v287 = vsel %vm283, %v276, %v250
    %v289 = vsel %vm283, %v279, %v252
    %v291 = vsel %vm283, %v282, %v254
    %vm292 = vcmask 785408
    %v294 = vsel %vm292, %v285, %v264
    %v297 = vsel %vm292, %v287, %v266
    %v300 = vsel %vm292, %v289, %v268
    %v303 = vsel %vm292, %v291, %v270
    %v305 = vld [vmem:[%s3] sm:$0xf]
    %v306 = vld [vmem:[%s3 + $0x4] sm:$0xf]
    %v307 = vld [vmem:[%s3 + $0x8] sm:$0xf]
    %v308 = vld [vmem:[%s3 + $0xc] sm:$0xf]
    %v309 = vld [vmem:[%s3 + $0x10] sm:$0xf]
    %v310 = vld [vmem:[%s3 + $0x14] sm:$0xf]
    %v311 = vld [vmem:[%s3 + $0x18] sm:$0xf]
    %v312 = vld [vmem:[%s3 + $0x1c] sm:$0xf]
    %v313 = vld [vmem:[%s3 + $0x20] sm:$0xf]
    %v314 = vld [vmem:[%s3 + $0x24] sm:$0xf]
    %v315 = vld [vmem:[%s3 + $0x28] sm:$0xf]
    %v316 = vld [vmem:[%s3 + $0x2c] sm:$0xf]
    %v317 = vld [vmem:[%s3 + $0x30] sm:$0xf]
    %v318 = vld [vmem:[%s3 + $0x34] sm:$0xf]
    %v319 = vld [vmem:[%s3 + $0x38] sm:$0xf]
    %v320 = vld [vmem:[%s3 + $0x3c] sm:$0xf]
    %v321 = vld [vmem:[%s3 + $0x40] sm:$0xf]
    %v322 = vld [vmem:[%s3 + $0x44] sm:$0xf]
    %v323 = vld [vmem:[%s3 + $0x48] sm:$0xf]
    %v324 = vld [vmem:[%s3 + $0x4c] sm:$0xf]
    %v345 = vunpack.c.l.b16 %v305
    %v346 = vunpack.c.l.b16 %v306
    %v347 = vunpack.c.l.b16 %v307
    %v348 = vunpack.c.l.b16 %v308
    %v349 = vunpack.c.l.b16 %v309
    %v350 = vunpack.c.l.b16 %v310
    %v351 = vunpack.c.l.b16 %v311
    %v352 = vunpack.c.l.b16 %v312
    %v353 = vunpack.c.l.b16 %v313
    %v354 = vunpack.c.l.b16 %v314
    %v355 = vunpack.c.l.b16 %v315
    %v356 = vunpack.c.l.b16 %v316
    %v357 = vunpack.c.l.b16 %v317
    %v358 = vunpack.c.l.b16 %v318
    %v359 = vunpack.c.l.b16 %v319
    %v360 = vunpack.c.l.b16 %v320
    %v361 = vunpack.c.l.b16 %v321
    %v362 = vunpack.c.l.b16 %v322
    %v363 = vunpack.c.l.b16 %v323
    %v364 = vunpack.c.l.b16 %v324
    %v365 = vpack.c.b16 %v346, %v345
    %v366 = vpack.c.b16 %v348, %v347
    %v367 = vpack.c.b16 %v350, %v349
    %v368 = vpack.c.b16 %v352, %v351
    %v369 = vpack.c.b16 %v354, %v353
    %v370 = vpack.c.b16 %v356, %v355
    %v371 = vpack.c.b16 %v358, %v357
    %v372 = vpack.c.b16 %v360, %v359
    %v373 = vpack.c.b16 %v362, %v361
    %v374 = vpack.c.b16 %v364, %v363
    %v385 = vsel %vm198, %v215, 0
    %v387 = vsel %vm198, %v216, 0
    %v390 = vsel %vm198, %v219, 0
    %v393 = vsel %vm198, %v222, 0
    %395 = vmatprep.subr.bf16.mxu0 0
    %396 = vmatpush1.bf16.msra.mxu0 %v365
    %397 = vmatprep.subr.bf16.mxu0 0
    %398 = vmatpush1.bf16.msra.mxu0 %v366
    %399 = vmatprep.subr.bf16.mxu0 0
    %400 = vmatpush1.bf16.msra.mxu0 %v367
    %401 = vmatprep.subr.bf16.mxu0 0
    %402 = vmatpush1.bf16.msra.mxu0 %v368
    %403 = vmatprep.subr.bf16.mxu0 0
    %404 = vmatpush1.bf16.msra.mxu0 %v369
    %405 = vmatprep.subr.bf16.mxu0 0
    %406 = vmatpush1.bf16.msra.mxu0 %v370
    %407 = vmatprep.subr.bf16.mxu0 0
    %408 = vmatpush1.bf16.msra.mxu0 %v371
    %409 = vmatprep.subr.bf16.mxu0 0
    %410 = vmatpush1.bf16.msra.mxu0 %v372
    %411 = vmatprep.subr.bf16.mxu0 0
    %412 = vmatpush1.bf16.msra.mxu0 %v373
    %413 = vmatprep.subr.bf16.mxu0 0
    %414 = vmatpush1.bf16.msra.mxu0 %v374
    %415 = vmatprep.subr.bf16.mxu0 0
    %416 = vmatpush1.bf16.msra.mxu0 0
    %417 = vmatprep.subr.bf16.mxu0 0
    %418 = vmatpush1.bf16.msra.mxu0 0
    %419 = vmatprep.subr.bf16.mxu0 0
    %420 = vmatpush1.bf16.msra.mxu0 0
    %421 = vmatprep.subr.bf16.mxu0 0
    %422 = vmatpush1.bf16.msra.mxu0 0
    %423 = vmatprep.subr.bf16.mxu0 0
    %424 = vmatpush1.bf16.msra.mxu0 0
    %425 = vmatprep.subr.bf16.mxu0 0
    %426 = vmatpush1.bf16.msra.mxu0 0
    %427 = vmatprep.mubr.bf16.mxu0 %v385
    %428 = vmatmul.mubr.bf16.gmra.mrb[0].mxu0 %v294
    %v429 = vpop.f32.mrb[0].mxu0
    %v430 = vadd.f32 0.0, %v429
    %v431 = vpop.f32.mrb[0].mxu0
    %v432 = vpop.f32.mrb[0].mxu0
    %v433 = vadd.f32 0.0, %v432
    %v434 = vpop.f32.mrb[0].mxu0
    %435 = vmatprep.mubr.bf16.mxu0 %v387
    %436 = vmatmul.mubr.bf16.gmra.mrb[0].mxu0 %v297
    %v437 = vpop.f32.mrb[0].mxu0
    %v438 = vadd.f32 0.0, %v437
    %v439 = vpop.f32.mrb[0].mxu0
    %v440 = vpop.f32.mrb[0].mxu0
    %v441 = vadd.f32 0.0, %v440
    %v442 = vpop.f32.mrb[0].mxu0
    %443 = vmatprep.mubr.bf16.mxu0 %v390
    %444 = vmatmul.mubr.bf16.gmra.mrb[0].mxu0 %v300
    %v445 = vpop.f32.mrb[0].mxu0
    %v446 = vadd.f32 0.0, %v445
    %v447 = vpop.f32.mrb[0].mxu0
    %v448 = vpop.f32.mrb[0].mxu0
    %v449 = vadd.f32 0.0, %v448
    %v450 = vpop.f32.mrb[0].mxu0
    %451 = vmatprep.mubr.bf16.mxu0 %v393
    %452 = vmatmul.mubr.bf16.gmra.mrb[0].mxu0 %v303
    %v453 = vpop.f32.mrb[0].mxu0
    %v454 = vadd.f32 0.0, %v453
    %v455 = vpop.f32.mrb[0].mxu0
    %v456 = vpop.f32.mrb[0].mxu0
    %v457 = vadd.f32 0.0, %v456
    %v458 = vpop.f32.mrb[0].mxu0
    %459 = vdwg.mxu0
    %v460 = vld [vmem:[%s4] sm:$0x1]
    %v462 = vlaneseq
    %v463 = vshrl.u32 %v462, 7
    %v464 = vsub.s32 0, %v463
    %v465 = vrot.slane %v460, %v464
    %v467 = vmul.f32 %v430, %v465
    %v468 = vmul.f32 %v433, %v465
    %v469 = vmul.f32 %v438, %v465
    %v470 = vmul.f32 %v441, %v465
    %v471 = vmul.f32 %v446, %v465
    %v472 = vmul.f32 %v449, %v465
    %v473 = vmul.f32 %v454, %v465
    %v474 = vmul.f32 %v457, %v465
    %v475 = vld [vmem:[%s5] sm:$0x1]
    %v477 = vlaneseq
    %v478 = vshrl.u32 %v477, 7
    %v479 = vsub.s32 0, %v478
    %v480 = vrot.slane %v475, %v479
    %v482 = vadd.f32 %v467, %v480
    %v483 = vadd.f32 %v468, %v480
    %v484 = vadd.f32 %v469, %v480
    %v485 = vadd.f32 %v470, %v480
    %v486 = vadd.f32 %v471, %v480
    %v487 = vadd.f32 %v472, %v480
    %v488 = vadd.f32 %v473, %v480
    %v489 = vadd.f32 %v474, %v480
    %v490 = vmax.f32 %v482, 0.0
    %v491 = vmax.f32 %v483, 0.0
    %v492 = vmax.f32 %v484, 0.0
    %v493 = vmax.f32 %v485, 0.0
    %v494 = vmax.f32 %v486, 0.0
    %v495 = vmax.f32 %v487, 0.0
    %v496 = vmax.f32 %v488, 0.0
    %v497 = vmax.f32 %v489, 0.0
    %v498 = vpack.c.bf16 %v491, %v490
    %v499 = vpack.c.bf16 %v493, %v492
    %v500 = vpack.c.bf16 %v495, %v494
    %v501 = vpack.c.bf16 %v497, %v496
    %502 = vst.msk [vmem:[#allocation2 + $0x8] sm:$0xff] %vm198, %v498
    %503 = vst.msk [vmem:[#allocation2 + $0x10] sm:$0xff] %vm198, %v499
    %504 = vst.msk [vmem:[#allocation2 + $0x18] sm:$0xff] %vm198, %v500
    %505 = vst.msk [vmem:[#allocation2 + $0x20] sm:$0xff] %vm198, %v501
    %v506 = vld [vmem:[#allocation2] sm:$0xff]
    %v507 = vld [vmem:[#allocation2 + $0x8] sm:$0xff]
    %v508 = vld [vmem:[#allocation2 + $0x10] sm:$0xff]
    %v509 = vld [vmem:[#allocation2 + $0x18] sm:$0xff]
    %v510 = vld [vmem:[#allocation2] sm:$0xf0]
    %v511 = vld [vmem:[#allocation2 + $0x20] sm:$0xf]
    %v512 = vld [vmem:[#allocation2 + $0x20] sm:$0xff]
    %v513 = vld [vmem:[#allocation2 + $0x8] sm:$0xf0]
    %v514 = vld [vmem:[#allocation2 + $0x28] sm:$0xf]
    %v515 = vld [vmem:[#allocation2 + $0x28] sm:$0xff]
    %v521 = vrot.slane %v510, 4
    %v522 = vrot.slane %v507, 4
    %v523 = vsel %vm228, %v521, %v522
    %v524 = vrot.slane %v508, 4
    %v525 = vsel %vm228, %v522, %v524
    %v526 = vrot.slane %v509, 4
    %v527 = vsel %vm228, %v524, %v526
    %v528 = vrot.slane %v511, 4
    %v529 = vsel %vm228, %v526, %v528
    %530 = vrot.lane.b32.xlu0 %v523, 32
    %v531 = vpop.permute.xlu0 %530
    %532 = vrot.lane.b32.xlu0 %v525, 32
    %v533 = vpop.permute.xlu0 %532
    %534 = vrot.lane.b32.xlu0 %v527, 32
    %v535 = vpop.permute.xlu0 %534
    %536 = vrot.lane.b32.xlu0 %v529, 32
    %v537 = vpop.permute.xlu0 %536
    %539 = vrot.lane.b32.xlu0 %v507, 64
    %v540 = vpop.permute.xlu0 %539
    %541 = vrot.lane.b32.xlu0 %v508, 64
    %v542 = vpop.permute.xlu0 %541
    %543 = vrot.lane.b32.xlu0 %v509, 64
    %v544 = vpop.permute.xlu0 %543
    %545 = vrot.lane.b32.xlu0 %v512, 64
    %v546 = vpop.permute.xlu0 %545
    %v549 = vrot.slane %v513, 4
    %v550 = vsel %vm228, %v549, %v524
    %v551 = vrot.slane %v512, 4
    %v552 = vsel %vm228, %v526, %v551
    %v553 = vrot.slane %v514, 4
    %v554 = vsel %vm228, %v551, %v553
    %555 = vrot.lane.b32.xlu0 %v550, 96
    %v556 = vpop.permute.xlu0 %555
    %557 = vrot.lane.b32.xlu0 %v527, 96
    %v558 = vpop.permute.xlu0 %557
    %559 = vrot.lane.b32.xlu0 %v552, 96
    %v560 = vpop.permute.xlu0 %559
    %561 = vrot.lane.b32.xlu0 %v554, 96
    %v562 = vpop.permute.xlu0 %561
    %v565 = vsel %vm198, %v506, %v531
    %v568 = vsel %vm198, %v507, %v533
    %v571 = vsel %vm198, %v508, %v535
    %v574 = vsel %vm198, %v509, %v537
    %v576 = vsel %vm283, %v565, %v540
    %v578 = vsel %vm283, %v568, %v542
    %v580 = vsel %vm283, %v571, %v544
    %v582 = vsel %vm283, %v574, %v546
    %v584 = vsel %vm292, %v576, %v556
    %v587 = vsel %vm292, %v578, %v558
    %v590 = vsel %vm292, %v580, %v560
    %v593 = vsel %vm292, %v582, %v562
    %s595 = scalar_lea.vmem %s3, 80
    %v596 = vld [vmem:[%s595] sm:$0xf]
    %v597 = vld [vmem:[%s595 + $0x4] sm:$0xf]
    %v598 = vld [vmem:[%s595 + $0x8] sm:$0xf]
    %v599 = vld [vmem:[%s595 + $0xc] sm:$0xf]
    %v600 = vld [vmem:[%s595 + $0x10] sm:$0xf]
    %v601 = vld [vmem:[%s595 + $0x14] sm:$0xf]
    %v602 = vld [vmem:[%s595 + $0x18] sm:$0xf]
    %v603 = vld [vmem:[%s595 + $0x1c] sm:$0xf]
    %v604 = vld [vmem:[%s595 + $0x20] sm:$0xf]
    %v605 = vld [vmem:[%s595 + $0x24] sm:$0xf]
    %v606 = vld [vmem:[%s595 + $0x28] sm:$0xf]
    %v607 = vld [vmem:[%s595 + $0x2c] sm:$0xf]
    %v608 = vld [vmem:[%s595 + $0x30] sm:$0xf]
    %v609 = vld [vmem:[%s595 + $0x34] sm:$0xf]
    %v610 = vld [vmem:[%s595 + $0x38] sm:$0xf]
    %v611 = vld [vmem:[%s595 + $0x3c] sm:$0xf]
    %v612 = vld [vmem:[%s595 + $0x40] sm:$0xf]
    %v613 = vld [vmem:[%s595 + $0x44] sm:$0xf]
    %v614 = vld [vmem:[%s595 + $0x48] sm:$0xf]
    %v615 = vld [vmem:[%s595 + $0x4c] sm:$0xf]
    %v636 = vunpack.c.l.b16 %v596
    %v637 = vunpack.c.l.b16 %v597
    %v638 = vunpack.c.l.b16 %v598
    %v639 = vunpack.c.l.b16 %v599
    %v640 = vunpack.c.l.b16 %v600
    %v641 = vunpack.c.l.b16 %v601
    %v642 = vunpack.c.l.b16 %v602
    %v643 = vunpack.c.l.b16 %v603
    %v644 = vunpack.c.l.b16 %v604
    %v645 = vunpack.c.l.b16 %v605
    %v646 = vunpack.c.l.b16 %v606
    %v647 = vunpack.c.l.b16 %v607
    %v648 = vunpack.c.l.b16 %v608
    %v649 = vunpack.c.l.b16 %v609
    %v650 = vunpack.c.l.b16 %v610
    %v651 = vunpack.c.l.b16 %v611
    %v652 = vunpack.c.l.b16 %v612
    %v653 = vunpack.c.l.b16 %v613
    %v654 = vunpack.c.l.b16 %v614
    %v655 = vunpack.c.l.b16 %v615
    %v656 = vpack.c.b16 %v637, %v636
    %v657 = vpack.c.b16 %v639, %v638
    %v658 = vpack.c.b16 %v641, %v640
    %v659 = vpack.c.b16 %v643, %v642
    %v660 = vpack.c.b16 %v645, %v644
    %v661 = vpack.c.b16 %v647, %v646
    %v662 = vpack.c.b16 %v649, %v648
    %v663 = vpack.c.b16 %v651, %v650
    %v664 = vpack.c.b16 %v653, %v652
    %v665 = vpack.c.b16 %v655, %v654
    %v676 = vsel %vm198, %v508, 0
    %v678 = vsel %vm198, %v509, 0
    %v681 = vsel %vm198, %v512, 0
    %v684 = vsel %vm198, %v515, 0
    %686 = vmatprep.subr.bf16.mxu0 0
    %687 = vmatpush1.bf16.msra.mxu0 %v656
    %688 = vmatprep.subr.bf16.mxu0 0
    %689 = vmatpush1.bf16.msra.mxu0 %v657
    %690 = vmatprep.subr.bf16.mxu0 0
    %691 = vmatpush1.bf16.msra.mxu0 %v658
    %692 = vmatprep.subr.bf16.mxu0 0
    %693 = vmatpush1.bf16.msra.mxu0 %v659
    %694 = vmatprep.subr.bf16.mxu0 0
    %695 = vmatpush1.bf16.msra.mxu0 %v660
    %696 = vmatprep.subr.bf16.mxu0 0
    %697 = vmatpush1.bf16.msra.mxu0 %v661
    %698 = vmatprep.subr.bf16.mxu0 0
    %699 = vmatpush1.bf16.msra.mxu0 %v662
    %700 = vmatprep.subr.bf16.mxu0 0
    %701 = vmatpush1.bf16.msra.mxu0 %v663
    %702 = vmatprep.subr.bf16.mxu0 0
    %703 = vmatpush1.bf16.msra.mxu0 %v664
    %704 = vmatprep.subr.bf16.mxu0 0
    %705 = vmatpush1.bf16.msra.mxu0 %v665
    %706 = vmatprep.subr.bf16.mxu0 0
    %707 = vmatpush1.bf16.msra.mxu0 0
    %708 = vmatprep.subr.bf16.mxu0 0
    %709 = vmatpush1.bf16.msra.mxu0 0
    %710 = vmatprep.subr.bf16.mxu0 0
    %711 = vmatpush1.bf16.msra.mxu0 0
    %712 = vmatprep.subr.bf16.mxu0 0
    %713 = vmatpush1.bf16.msra.mxu0 0
    %714 = vmatprep.subr.bf16.mxu0 0
    %715 = vmatpush1.bf16.msra.mxu0 0
    %716 = vmatprep.subr.bf16.mxu0 0
    %717 = vmatpush1.bf16.msra.mxu0 0
    %718 = vmatprep.mubr.bf16.mxu0 %v676
    %719 = vmatmul.mubr.bf16.gmra.mrb[0].mxu0 %v584
    %v720 = vpop.f32.mrb[0].mxu0
    %v721 = vadd.f32 0.0, %v720
    %v722 = vpop.f32.mrb[0].mxu0
    %v723 = vpop.f32.mrb[0].mxu0
    %v724 = vadd.f32 0.0, %v723
    %v725 = vpop.f32.mrb[0].mxu0
    %726 = vmatprep.mubr.bf16.mxu0 %v678
    %727 = vmatmul.mubr.bf16.gmra.mrb[0].mxu0 %v587
    %v728 = vpop.f32.mrb[0].mxu0
    %v729 = vadd.f32 0.0, %v728
    %v730 = vpop.f32.mrb[0].mxu0
    %v731 = vpop.f32.mrb[0].mxu0
    %v732 = vadd.f32 0.0, %v731
    %v733 = vpop.f32.mrb[0].mxu0
    %734 = vmatprep.mubr.bf16.mxu0 %v681
    %735 = vmatmul.mubr.bf16.gmra.mrb[0].mxu0 %v590
    %v736 = vpop.f32.mrb[0].mxu0
    %v737 = vadd.f32 0.0, %v736
    %v738 = vpop.f32.mrb[0].mxu0
    %v739 = vpop.f32.mrb[0].mxu0
    %v740 = vadd.f32 0.0, %v739
    %v741 = vpop.f32.mrb[0].mxu0
    %742 = vmatprep.mubr.bf16.mxu0 %v684
    %743 = vmatmul.mubr.bf16.gmra.mrb[0].mxu0 %v593
    %v744 = vpop.f32.mrb[0].mxu0
    %v745 = vadd.f32 0.0, %v744
    %v746 = vpop.f32.mrb[0].mxu0
    %v747 = vpop.f32.mrb[0].mxu0
    %v748 = vadd.f32 0.0, %v747
    %v749 = vpop.f32.mrb[0].mxu0
    %750 = vdwg.mxu0
    %s751 = scalar_lea.vmem %s4, 1
    %v752 = vld [vmem:[%s751] sm:$0x1]
    %v754 = vlaneseq
    %v755 = vshrl.u32 %v754, 7
    %v756 = vsub.s32 0, %v755
    %v757 = vrot.slane %v752, %v756
    %v759 = vmul.f32 %v721, %v757
    %v760 = vmul.f32 %v724, %v757
    %v761 = vmul.f32 %v729, %v757
    %v762 = vmul.f32 %v732, %v757
    %v763 = vmul.f32 %v737, %v757
    %v764 = vmul.f32 %v740, %v757
    %v765 = vmul.f32 %v745, %v757
    %v766 = vmul.f32 %v748, %v757
    %s767 = scalar_lea.vmem %s5, 1
    %v768 = vld [vmem:[%s767] sm:$0x1]
    %v770 = vlaneseq
    %v771 = vshrl.u32 %v770, 7
    %v772 = vsub.s32 0, %v771
    %v773 = vrot.slane %v768, %v772
    %v775 = vadd.f32 %v759, %v773
    %v776 = vadd.f32 %v760, %v773
    %v777 = vadd.f32 %v761, %v773
    %v778 = vadd.f32 %v762, %v773
    %v779 = vadd.f32 %v763, %v773
    %v780 = vadd.f32 %v764, %v773
    %v781 = vadd.f32 %v765, %v773
    %v782 = vadd.f32 %v766, %v773
    %v783 = vmax.f32 %v775, 0.0
    %v784 = vmax.f32 %v776, 0.0
    %v785 = vmax.f32 %v777, 0.0
    %v786 = vmax.f32 %v778, 0.0
    %v787 = vmax.f32 %v779, 0.0
    %v788 = vmax.f32 %v780, 0.0
    %v789 = vmax.f32 %v781, 0.0
    %v790 = vmax.f32 %v782, 0.0
    %v791 = vpack.c.bf16 %v784, %v783
    %v792 = vpack.c.bf16 %v786, %v785
    %v793 = vpack.c.bf16 %v788, %v787
    %v794 = vpack.c.bf16 %v790, %v789
    %795 = vst.msk [vmem:[#allocation2 + $0x8] sm:$0xff] %vm198, %v791
    %796 = vst.msk [vmem:[#allocation2 + $0x10] sm:$0xff] %vm198, %v792
    %797 = vst.msk [vmem:[#allocation2 + $0x18] sm:$0xff] %vm198, %v793
    %798 = vst.msk [vmem:[#allocation2 + $0x20] sm:$0xff] %vm198, %v794
    %v799 = vld [vmem:[#allocation2] sm:$0xff]
    %v800 = vld [vmem:[#allocation2 + $0x8] sm:$0xff]
    %v801 = vld [vmem:[#allocation2 + $0x10] sm:$0xff]
    %v802 = vld [vmem:[#allocation2 + $0x18] sm:$0xff]
    %v803 = vld [vmem:[#allocation2] sm:$0xf0]
    %v804 = vld [vmem:[#allocation2 + $0x20] sm:$0xf]
    %v805 = vld [vmem:[#allocation2 + $0x20] sm:$0xff]
    %v806 = vld [vmem:[#allocation2 + $0x8] sm:$0xf0]
    %v807 = vld [vmem:[#allocation2 + $0x28] sm:$0xf]
    %v808 = vld [vmem:[#allocation2 + $0x28] sm:$0xff]
    %v814 = vrot.slane %v803, 4
    %v815 = vrot.slane %v800, 4
    %v816 = vsel %vm228, %v814, %v815
    %v817 = vrot.slane %v801, 4
    %v818 = vsel %vm228, %v815, %v817
    %v819 = vrot.slane %v802, 4
    %v820 = vsel %vm228, %v817, %v819
    %v821 = vrot.slane %v804, 4
    %v822 = vsel %vm228, %v819, %v821
    %823 = vrot.lane.b32.xlu0 %v816, 32
    %v824 = vpop.permute.xlu0 %823
    %825 = vrot.lane.b32.xlu0 %v818, 32
    %v826 = vpop.permute.xlu0 %825
    %827 = vrot.lane.b32.xlu0 %v820, 32
    %v828 = vpop.permute.xlu0 %827
    %829 = vrot.lane.b32.xlu0 %v822, 32
    %v830 = vpop.permute.xlu0 %829
    %832 = vrot.lane.b32.xlu0 %v800, 64
    %v833 = vpop.permute.xlu0 %832
    %834 = vrot.lane.b32.xlu0 %v801, 64
    %v835 = vpop.permute.xlu0 %834
    %836 = vrot.lane.b32.xlu0 %v802, 64
    %v837 = vpop.permute.xlu0 %836
    %838 = vrot.lane.b32.xlu0 %v805, 64
    %v839 = vpop.permute.xlu0 %838
    %v842 = vrot.slane %v806, 4
    %v843 = vsel %vm228, %v842, %v817
    %v844 = vrot.slane %v805, 4
    %v845 = vsel %vm228, %v819, %v844
    %v846 = vrot.slane %v807, 4
    %v847 = vsel %vm228, %v844, %v846
    %848 = vrot.lane.b32.xlu0 %v843, 96
    %v849 = vpop.permute.xlu0 %848
    %850 = vrot.lane.b32.xlu0 %v820, 96
    %v851 = vpop.permute.xlu0 %850
    %852 = vrot.lane.b32.xlu0 %v845, 96
    %v853 = vpop.permute.xlu0 %852
    %854 = vrot.lane.b32.xlu0 %v847, 96
    %v855 = vpop.permute.xlu0 %854
    %v858 = vsel %vm198, %v799, %v824
    %v861 = vsel %vm198, %v800, %v826
    %v864 = vsel %vm198, %v801, %v828
    %v867 = vsel %vm198, %v802, %v830
    %v869 = vsel %vm283, %v858, %v833
    %v871 = vsel %vm283, %v861, %v835
    %v873 = vsel %vm283, %v864, %v837
    %v875 = vsel %vm283, %v867, %v839
    %v877 = vsel %vm292, %v869, %v849
    %v880 = vsel %vm292, %v871, %v851
    %v883 = vsel %vm292, %v873, %v853
    %v886 = vsel %vm292, %v875, %v855
    %s888 = scalar_lea.vmem %s3, 160
    %v889 = vld [vmem:[%s888] sm:$0xf]
    %v890 = vld [vmem:[%s888 + $0x4] sm:$0xf]
    %v891 = vld [vmem:[%s888 + $0x8] sm:$0xf]
    %v892 = vld [vmem:[%s888 + $0xc] sm:$0xf]
    %v893 = vld [vmem:[%s888 + $0x10] sm:$0xf]
    %v894 = vld [vmem:[%s888 + $0x14] sm:$0xf]
    %v895 = vld [vmem:[%s888 + $0x18] sm:$0xf]
    %v896 = vld [vmem:[%s888 + $0x1c] sm:$0xf]
    %v897 = vld [vmem:[%s888 + $0x20] sm:$0xf]
    %v898 = vld [vmem:[%s888 + $0x24] sm:$0xf]
    %v899 = vld [vmem:[%s888 + $0x28] sm:$0xf]
    %v900 = vld [vmem:[%s888 + $0x2c] sm:$0xf]
    %v901 = vld [vmem:[%s888 + $0x30] sm:$0xf]
    %v902 = vld [vmem:[%s888 + $0x34] sm:$0xf]
    %v903 = vld [vmem:[%s888 + $0x38] sm:$0xf]
    %v904 = vld [vmem:[%s888 + $0x3c] sm:$0xf]
    %v905 = vld [vmem:[%s888 + $0x40] sm:$0xf]
    %v906 = vld [vmem:[%s888 + $0x44] sm:$0xf]
    %v907 = vld [vmem:[%s888 + $0x48] sm:$0xf]
    %v908 = vld [vmem:[%s888 + $0x4c] sm:$0xf]
    %v929 = vunpack.c.l.b16 %v889
    %v930 = vunpack.c.l.b16 %v890
    %v931 = vunpack.c.l.b16 %v891
    %v932 = vunpack.c.l.b16 %v892
    %v933 = vunpack.c.l.b16 %v893
    %v934 = vunpack.c.l.b16 %v894
    %v935 = vunpack.c.l.b16 %v895
    %v936 = vunpack.c.l.b16 %v896
    %v937 = vunpack.c.l.b16 %v897
    %v938 = vunpack.c.l.b16 %v898
    %v939 = vunpack.c.l.b16 %v899
    %v940 = vunpack.c.l.b16 %v900
    %v941 = vunpack.c.l.b16 %v901
    %v942 = vunpack.c.l.b16 %v902
    %v943 = vunpack.c.l.b16 %v903
    %v944 = vunpack.c.l.b16 %v904
    %v945 = vunpack.c.l.b16 %v905
    %v946 = vunpack.c.l.b16 %v906
    %v947 = vunpack.c.l.b16 %v907
    %v948 = vunpack.c.l.b16 %v908
    %v949 = vpack.c.b16 %v930, %v929
    %v950 = vpack.c.b16 %v932, %v931
    %v951 = vpack.c.b16 %v934, %v933
    %v952 = vpack.c.b16 %v936, %v935
    %v953 = vpack.c.b16 %v938, %v937
    %v954 = vpack.c.b16 %v940, %v939
    %v955 = vpack.c.b16 %v942, %v941
    %v956 = vpack.c.b16 %v944, %v943
    %v957 = vpack.c.b16 %v946, %v945
    %v958 = vpack.c.b16 %v948, %v947
    %v969 = vsel %vm198, %v801, 0
    %v971 = vsel %vm198, %v802, 0
    %v974 = vsel %vm198, %v805, 0
    %v977 = vsel %vm198, %v808, 0
    %979 = vmatprep.subr.bf16.mxu0 0
    %980 = vmatpush1.bf16.msra.mxu0 %v949
    %981 = vmatprep.subr.bf16.mxu0 0
    %982 = vmatpush1.bf16.msra.mxu0 %v950
    %983 = vmatprep.subr.bf16.mxu0 0
    %984 = vmatpush1.bf16.msra.mxu0 %v951
    %985 = vmatprep.subr.bf16.mxu0 0
    %986 = vmatpush1.bf16.msra.mxu0 %v952
    %987 = vmatprep.subr.bf16.mxu0 0
    %988 = vmatpush1.bf16.msra.mxu0 %v953
    %989 = vmatprep.subr.bf16.mxu0 0
    %990 = vmatpush1.bf16.msra.mxu0 %v954
    %991 = vmatprep.subr.bf16.mxu0 0
    %992 = vmatpush1.bf16.msra.mxu0 %v955
    %993 = vmatprep.subr.bf16.mxu0 0
    %994 = vmatpush1.bf16.msra.mxu0 %v956
    %995 = vmatprep.subr.bf16.mxu0 0
    %996 = vmatpush1.bf16.msra.mxu0 %v957
    %997 = vmatprep.subr.bf16.mxu0 0
    %998 = vmatpush1.bf16.msra.mxu0 %v958
    %999 = vmatprep.subr.bf16.mxu0 0
    %1000 = vmatpush1.bf16.msra.mxu0 0
    %1001 = vmatprep.subr.bf16.mxu0 0
    %1002 = vmatpush1.bf16.msra.mxu0 0
    %1003 = vmatprep.subr.bf16.mxu0 0
    %1004 = vmatpush1.bf16.msra.mxu0 0
    %1005 = vmatprep.subr.bf16.mxu0 0
    %1006 = vmatpush1.bf16.msra.mxu0 0
    %1007 = vmatprep.subr.bf16.mxu0 0
    %1008 = vmatpush1.bf16.msra.mxu0 0
    %1009 = vmatprep.subr.bf16.mxu0 0
    %1010 = vmatpush1.bf16.msra.mxu0 0
    %1011 = vmatprep.mubr.bf16.mxu0 %v969
    %1012 = vmatmul.mubr.bf16.gmra.mrb[0].mxu0 %v877
    %v1013 = vpop.f32.mrb[0].mxu0
    %v1014 = vadd.f32 0.0, %v1013
    %v1015 = vpop.f32.mrb[0].mxu0
    %v1016 = vpop.f32.mrb[0].mxu0
    %v1017 = vadd.f32 0.0, %v1016
    %v1018 = vpop.f32.mrb[0].mxu0
    %1019 = vmatprep.mubr.bf16.mxu0 %v971
    %1020 = vmatmul.mubr.bf16.gmra.mrb[0].mxu0 %v880
    %v1021 = vpop.f32.mrb[0].mxu0
    %v1022 = vadd.f32 0.0, %v1021
    %v1023 = vpop.f32.mrb[0].mxu0
    %v1024 = vpop.f32.mrb[0].mxu0
    %v1025 = vadd.f32 0.0, %v1024
    %v1026 = vpop.f32.mrb[0].mxu0
    %1027 = vmatprep.mubr.bf16.mxu0 %v974
    %1028 = vmatmul.mubr.bf16.gmra.mrb[0].mxu0 %v883
    %v1029 = vpop.f32.mrb[0].mxu0
    %v1030 = vadd.f32 0.0, %v1029
    %v1031 = vpop.f32.mrb[0].mxu0
    %v1032 = vpop.f32.mrb[0].mxu0
    %v1033 = vadd.f32 0.0, %v1032
    %v1034 = vpop.f32.mrb[0].mxu0
    %1035 = vmatprep.mubr.bf16.mxu0 %v977
    %1036 = vmatmul.mubr.bf16.gmra.mrb[0].mxu0 %v886
    %v1037 = vpop.f32.mrb[0].mxu0
    %v1038 = vadd.f32 0.0, %v1037
    %v1039 = vpop.f32.mrb[0].mxu0
    %v1040 = vpop.f32.mrb[0].mxu0
    %v1041 = vadd.f32 0.0, %v1040
    %v1042 = vpop.f32.mrb[0].mxu0
    %1043 = vdwg.mxu0
    %s1044 = scalar_lea.vmem %s4, 2
    %v1045 = vld [vmem:[%s1044] sm:$0x1]
    %v1047 = vlaneseq
    %v1048 = vshrl.u32 %v1047, 7
    %v1049 = vsub.s32 0, %v1048
    %v1050 = vrot.slane %v1045, %v1049
    %v1052 = vmul.f32 %v1014, %v1050
    %v1053 = vmul.f32 %v1017, %v1050
    %v1054 = vmul.f32 %v1022, %v1050
    %v1055 = vmul.f32 %v1025, %v1050
    %v1056 = vmul.f32 %v1030, %v1050
    %v1057 = vmul.f32 %v1033, %v1050
    %v1058 = vmul.f32 %v1038, %v1050
    %v1059 = vmul.f32 %v1041, %v1050
    %s1060 = scalar_lea.vmem %s5, 2
    %v1061 = vld [vmem:[%s1060] sm:$0x1]
    %v1063 = vlaneseq
    %v1064 = vshrl.u32 %v1063, 7
    %v1065 = vsub.s32 0, %v1064
    %v1066 = vrot.slane %v1061, %v1065
    %v1068 = vadd.f32 %v1052, %v1066
    %v1069 = vadd.f32 %v1053, %v1066
    %v1070 = vadd.f32 %v1054, %v1066
    %v1071 = vadd.f32 %v1055, %v1066
    %v1072 = vadd.f32 %v1056, %v1066
    %v1073 = vadd.f32 %v1057, %v1066
    %v1074 = vadd.f32 %v1058, %v1066
    %v1075 = vadd.f32 %v1059, %v1066
    %v1076 = vmax.f32 %v1068, 0.0
    %v1077 = vmax.f32 %v1069, 0.0
    %v1078 = vmax.f32 %v1070, 0.0
    %v1079 = vmax.f32 %v1071, 0.0
    %v1080 = vmax.f32 %v1072, 0.0
    %v1081 = vmax.f32 %v1073, 0.0
    %v1082 = vmax.f32 %v1074, 0.0
    %v1083 = vmax.f32 %v1075, 0.0
    %v1084 = vpack.c.bf16 %v1077, %v1076
    %v1085 = vpack.c.bf16 %v1079, %v1078
    %v1086 = vpack.c.bf16 %v1081, %v1080
    %v1087 = vpack.c.bf16 %v1083, %v1082
    %v1088 = vld [vmem:[%s6] sm:$0xf]
    %v1089 = vld [vmem:[%s6 + $0x4] sm:$0xf]
    %v1090 = vld [vmem:[%s6 + $0x8] sm:$0xf]
    %v1091 = vld [vmem:[%s6 + $0xc] sm:$0xf]
    %v1092 = vld [vmem:[%s8] sm:$0x1]
    %v1094 = vlaneseq
    %v1095 = vshrl.u32 %v1094, 7
    %v1096 = vsub.s32 0, %v1095
    %v1097 = vrot.slane %v1092, %v1096
    %v1103 = vunpack.c.l.b16 %v1088
    %v1104 = vunpack.c.l.b16 %v1089
    %v1105 = vunpack.c.l.b16 %v1090
    %v1106 = vunpack.c.l.b16 %v1091
    %v1107 = vpack.c.b16 %v1104, %v1103
    %v1108 = vpack.c.b16 %v1106, %v1105
    %v1112 = vsel %vm198, %v1084, 0
    %v1115 = vsel %vm198, %v1085, 0
    %v1118 = vsel %vm198, %v1086, 0
    %v1121 = vsel %vm198, %v1087, 0
    %1123 = vmatprep.subr.bf16.mxu0 0
    %1124 = vmatpush1.bf16.msra.mxu0 %v1107
    %1125 = vmatprep.subr.bf16.mxu0 0
    %1126 = vmatpush1.bf16.msra.mxu0 %v1108
    %1127 = vmatprep.subr.bf16.mxu0 0
    %1128 = vmatpush1.bf16.msra.mxu0 0
    %1129 = vmatprep.subr.bf16.mxu0 0
    %1130 = vmatpush1.bf16.msra.mxu0 0
    %1131 = vmatprep.subr.bf16.mxu0 0
    %1132 = vmatpush1.bf16.msra.mxu0 0
    %1133 = vmatprep.subr.bf16.mxu0 0
    %1134 = vmatpush1.bf16.msra.mxu0 0
    %1135 = vmatprep.subr.bf16.mxu0 0
    %1136 = vmatpush1.bf16.msra.mxu0 0
    %1137 = vmatprep.subr.bf16.mxu0 0
    %1138 = vmatpush1.bf16.msra.mxu0 0
    %1139 = vmatprep.subr.bf16.mxu0 0
    %1140 = vmatpush1.bf16.msra.mxu0 0
    %1141 = vmatprep.subr.bf16.mxu0 0
    %1142 = vmatpush1.bf16.msra.mxu0 0
    %1143 = vmatprep.subr.bf16.mxu0 0
    %1144 = vmatpush1.bf16.msra.mxu0 0
    %1145 = vmatprep.subr.bf16.mxu0 0
    %1146 = vmatpush1.bf16.msra.mxu0 0
    %1147 = vmatprep.subr.bf16.mxu0 0
    %1148 = vmatpush1.bf16.msra.mxu0 0
    %1149 = vmatprep.subr.bf16.mxu0 0
    %1150 = vmatpush1.bf16.msra.mxu0 0
    %1151 = vmatprep.subr.bf16.mxu0 0
    %1152 = vmatpush1.bf16.msra.mxu0 0
    %1153 = vmatprep.subr.bf16.mxu0 0
    %1154 = vmatpush1.bf16.msra.mxu0 0
    %1155 = vmatprep.mubr.bf16.mxu0 0
    %1156 = vmatmul.mubr.bf16.gmra.mrb[0].mxu0 %v1112
    %v1157 = vpop.f32.mrb[0].mxu0
    %v1158 = vadd.f32 %v1097, %v1157
    %v1159 = vpop.f32.mrb[0].mxu0
    %v1160 = vpop.f32.mrb[0].mxu0
    %v1161 = vadd.f32 %v1097, %v1160
    %v1162 = vpop.f32.mrb[0].mxu0
    %1163 = vmatprep.mubr.bf16.mxu0 0
    %1164 = vmatmul.mubr.bf16.gmra.mrb[0].mxu0 %v1115
    %v1165 = vpop.f32.mrb[0].mxu0
    %v1166 = vadd.f32 %v1097, %v1165
    %v1167 = vpop.f32.mrb[0].mxu0
    %v1168 = vpop.f32.mrb[0].mxu0
    %v1169 = vadd.f32 %v1097, %v1168
    %v1170 = vpop.f32.mrb[0].mxu0
    %1171 = vmatprep.mubr.bf16.mxu0 0
    %1172 = vmatmul.mubr.bf16.gmra.mrb[0].mxu0 %v1118
    %v1173 = vpop.f32.mrb[0].mxu0
    %v1174 = vadd.f32 %v1097, %v1173
    %v1175 = vpop.f32.mrb[0].mxu0
    %v1176 = vpop.f32.mrb[0].mxu0
    %v1177 = vadd.f32 %v1097, %v1176
    %v1178 = vpop.f32.mrb[0].mxu0
    %1179 = vmatprep.mubr.bf16.mxu0 0
    %1180 = vmatmul.mubr.bf16.gmra.mrb[0].mxu0 %v1121
    %v1181 = vpop.f32.mrb[0].mxu0
    %v1182 = vadd.f32 %v1097, %v1181
    %v1183 = vpop.f32.mrb[0].mxu0
    %v1184 = vpop.f32.mrb[0].mxu0
    %v1185 = vadd.f32 %v1097, %v1184
    %v1186 = vpop.f32.mrb[0].mxu0
    %1187 = vdwg.mxu0
    %1188 = vst [vmem:[#allocation3] sm:$0xff] %v1158
    %1189 = vst [vmem:[#allocation3 + $0x8] sm:$0xff] %v1161
    %1190 = vst [vmem:[#allocation3 + $0x10] sm:$0xff] %v1166
    %1191 = vst [vmem:[#allocation3 + $0x18] sm:$0xff] %v1169
    %1192 = vst [vmem:[#allocation3 + $0x20] sm:$0xff] %v1174
    %1193 = vst [vmem:[#allocation3 + $0x28] sm:$0xff] %v1177
    %1194 = vst [vmem:[#allocation3 + $0x30] sm:$0xff] %v1182
    %1195 = vst [vmem:[#allocation3 + $0x38] sm:$0xff] %v1185
    %vm1196 = vcmp.lt.s32.totalorder %v43, 0
    %v1197 = vsub.s32 0, %v43
    %v1198 = vsel %vm1196, %v1197, %v43
    %v1199 = vshrl.u32 %v1198, 5
    %v1200 = vand.u32 %v1198, 31
    %v1201 = vsub.s32 0, %v1200
    %v1202 = vsel %vm1196, %v1201, %v1200
    %vm1203 = vcmp.ne.s32.totalorder %v1202, 0
    %vm1204 = vcmp.lt.s32.totalorder %v1202, 0
    %vm1205 = vmand %vm1204, %vm1203
    %v1206 = vadd.s32 %v1202, 32
    %v1207 = vsel %vm1205, %v1206, %v1202
    %vm1208 = vcmp.lt.s32.totalorder %v1207, 16
    %vm1209 = vcmp.lt.s32.totalorder %v43, 16
    %v1210 = vld [vmem:[%s1] sm:$0xff]
    loop: start=0, step=1, limit=4
    $region38: #{tpu_custom_call.1} parent=1 // loop_pre_header
      _
    $region39: #{tpu_custom_call.1} parent=1 // loop_header
      %s1212 = sphi 0, %s1216
      %p1213 = scmp.ge.s32.totalorder %s1212, 4
    $region40: #{tpu_custom_call.1} parent=1 // loop_header_branch
      %1215 = sbr.rel (%p1213) target = $region44
    $region41: #{tpu_custom_call.1} parent=1 // loop_body
      %s1217 = ssub.s32 7, %s1212
      %s1218 = smul.u32 %s1212, 8
      %s1219 = smul.u32 %s1217, 8
      %s1220 = scalar_lea.vmem [#allocation3], %s1218
      %v1221 = vld [vmem:[%s1220] sm:$0xff]
      %s1222 = scalar_lea.vmem [#allocation3], %s1219
      %v1223 = vld [vmem:[%s1222] sm:$0xff]
      %v1224 = vsel %vm1208, %v1221, %v1223
      %1225 = vst [vmem:[%s1220] sm:$0xff] %v1224
      %v1226 = vsel %vm1208, %v1223, %v1221
      %1227 = vst [vmem:[%s1222] sm:$0xff] %v1226
    $region42: #{tpu_custom_call.1} parent=1 // loop_footer
      %s1216 = sadd.s32 1, %s1212
    $region43: #{tpu_custom_call.1} parent=1 // loop_footer_branch
      %1211 = sbr.rel target = $region39
    $region44: #{tpu_custom_call.1} parent=1 // loop_exit
      _
    %v1228 = vld [vmem:[%s7] sm:$0xf]
    %v1229 = vld [vmem:[%s7 + $0x4] sm:$0xf]
    %v1230 = vld [vmem:[%s7 + $0x8] sm:$0xf]
    %v1231 = vld [vmem:[%s7 + $0xc] sm:$0xf]
    loop: start=0, step=1, limit=8
    $region45: #{tpu_custom_call.1} parent=1 // loop_pre_header
      _
    $region46: #{tpu_custom_call.1} parent=1 // loop_header
      %s1233 = sphi 0, %s1237
      %p1234 = scmp.ge.s32.totalorder %s1233, 8
      %v1238 = vphi 0.0, %v1343
      %v1239 = vphi 0.0, %v1348
    $region47: #{tpu_custom_call.1} parent=1 // loop_header_branch
      %1236 = sbr.rel (%p1234) target = $region51
    $region48: #{tpu_custom_call.1} parent=1 // loop_body
      %s1240 = smul.u32 %s1233, 8
      %s1241 = scalar_lea.vmem [#allocation3], %s1240
      %v1242 = vld [vmem:[%s1241] sm:$0xff]
      %v1243 = vpack.c.bf16 %v1238, %v1238
      %v1248 = vunpack.c.l.b16 %v1228
      %v1249 = vunpack.c.l.b16 %v1229
      %v1250 = vunpack.c.l.b16 %v1230
      %v1251 = vunpack.c.l.b16 %v1231
      %v1252 = vpack.c.b16 %v1249, %v1248
      %v1253 = vpack.c.b16 %v1251, %v1250
      %v1257 = vsel %vm198, %v1243, 0
      %1259 = vmatprep.subr.bf16.mxu0 0
      %1260 = vmatpush1.bf16.msra.mxu0 %v1252
      %1261 = vmatprep.subr.bf16.mxu0 0
      %1262 = vmatpush1.bf16.msra.mxu0 %v1253
      %1263 = vmatprep.subr.bf16.mxu0 0
      %1264 = vmatpush1.bf16.msra.mxu0 0
      %1265 = vmatprep.subr.bf16.mxu0 0
      %1266 = vmatpush1.bf16.msra.mxu0 0
      %1267 = vmatprep.subr.bf16.mxu0 0
      %1268 = vmatpush1.bf16.msra.mxu0 0
      %1269 = vmatprep.subr.bf16.mxu0 0
      %1270 = vmatpush1.bf16.msra.mxu0 0
      %1271 = vmatprep.subr.bf16.mxu0 0
      %1272 = vmatpush1.bf16.msra.mxu0 0
      %1273 = vmatprep.subr.bf16.mxu0 0
      %1274 = vmatpush1.bf16.msra.mxu0 0
      %1275 = vmatprep.subr.bf16.mxu0 0
      %1276 = vmatpush1.bf16.msra.mxu0 0
      %1277 = vmatprep.subr.bf16.mxu0 0
      %1278 = vmatpush1.bf16.msra.mxu0 0
      %1279 = vmatprep.subr.bf16.mxu0 0
      %1280 = vmatpush1.bf16.msra.mxu0 0
      %1281 = vmatprep.subr.bf16.mxu0 0
      %1282 = vmatpush1.bf16.msra.mxu0 0
      %1283 = vmatprep.subr.bf16.mxu0 0
      %1284 = vmatpush1.bf16.msra.mxu0 0
      %1285 = vmatprep.subr.bf16.mxu0 0
      %1286 = vmatpush1.bf16.msra.mxu0 0
      %1287 = vmatprep.subr.bf16.mxu0 0
      %1288 = vmatpush1.bf16.msra.mxu0 0
      %1289 = vmatprep.subr.bf16.mxu0 0
      %1290 = vmatpush1.bf16.msra.mxu0 0
      %1291 = vmatprep.mubr.bf16.mxu0 0
      %1292 = vmatmul.mubr.bf16.gmra.mrb[0].mxu0 %v1257
      %v1293 = vpop.f32.mrb[0].mxu0
      %v1294 = vadd.f32 0.0, %v1293
      %v1295 = vpop.f32.mrb[0].mxu0
      %v1296 = vpop.f32.mrb[0].mxu0
      %v1297 = vpop.f32.mrb[0].mxu0
      %1298 = vdwg.mxu0
      %v1299 = vadd.f32 %v1242, %v1294
      %v1300 = vxor.u32 %v1299, 2147483648
      %v1301 = vmul.f32 %v1300, 1.442695
      %v1302 = vpow.pop %v1301
      %v1303 = vadd.f32 %v1302, 1.0
      %v1304 = vrcp.pop %v1303
      %v1305 = vmul.f32 1.0, %v1304
      %v1306 = vtanh.pop %v1299
      %1308 = vrot.lane.b32.xlu0 %v1239, 32
      %v1309 = vpop.permute.xlu0 %1308
      %v1311 = vmul.f32 %v1305, %v1309
      %1313 = vrot.lane.b32.xlu0 %v1306, 64
      %v1314 = vpop.permute.xlu0 %1313
      %v1316 = vmul.f32 %v1305, %v1314
      %1318 = vrot.lane.b32.xlu0 %v1316, 32
      %v1319 = vpop.permute.xlu0 %1318
      %v1321 = vadd.f32 %v1311, %v1319
      %v1322 = vtanh.pop %v1321
      %1324 = vrot.lane.b32.xlu0 %v1322, 64
      %v1325 = vpop.permute.xlu0 %1324
      %v1327 = vmul.f32 %v1305, %v1325
      %s1328 = scvt.s32.f32 %s1233
      %s1329 = ssub.f32 7.0, %s1328
      %v1330 = vstv %s1328
      %v1331 = vstv %s1329
      %v1332 = vsel %vm1209, %v1330, %v1331
      %1334 = vset.pattern.permute.xlu0 0
      %1335 = vperm.xlu0 %1334, %v1210
      %v1336 = vpop.permute.xlu0 %1335
      %vm1338 = vcmp.lt.f32.partialorder %v1332, %v1336
      %1340 = vrot.lane.b32.xlu0 %v1327, 32
      %v1341 = vpop.permute.xlu0 %1340
      %v1343 = vsel %vm1338, %v1341, %v1238
      %1345 = vrot.lane.b32.xlu0 %v1321, 96
      %v1346 = vpop.permute.xlu0 %1345
      %v1348 = vsel %vm1338, %v1346, %v1239
    $region49: #{tpu_custom_call.1} parent=1 // loop_footer
      %s1237 = sadd.s32 1, %s1233
    $region50: #{tpu_custom_call.1} parent=1 // loop_footer_branch
      %1232 = sbr.rel target = $region46
    $region51: #{tpu_custom_call.1} parent=1 // loop_exit
      _
    %1350 = vrot.lane.b32.xlu0 %v1238, 112
    %v1351 = vpop.permute.xlu0 %1350
    %1353 = vrot.lane.b32.xlu0 %v1238, 16
    %v1354 = vpop.permute.xlu0 %1353
    %vm1356 = vcmask 130048
    %v1357 = vsel %vm1356, %v1351, %v1354
    %v1358 = vsel %vm198, %v1357, 0.0
    %1359 = vst [vmem:[#allocation4] sm:$0xff] %v1358
    // Predicated region
    $region52: #{tpu_custom_call.1} parent=1 // pred_check
      _
    $region53: #{tpu_custom_call.1} parent=1 // pred_check_branch
      %1361 = sbr.rel (0) target = $region55
    $region54: #{tpu_custom_call.1} parent=1 // pred_region
      %s1363 = ssub.s32 128, 128
      %1364 = vsyncadd [#allocation5], %s1363
      %s1366 = sshll.u32 [#allocation4], 4
      %s1367 = int_to_ptr.vmem [resolvable:$true] %s1366
      %1369 = dma.vmem_to_hbm [thread:$0]  %s1367, 128, %s9, [#allocation5]
    $region55: #{tpu_custom_call.1} parent=1 // pred_fallthru
      _
    // Predicated region
    $region56: #{tpu_custom_call.1} parent=1 // pred_check
      _
    $region57: #{tpu_custom_call.1} parent=1 // pred_check_branch
      %1371 = sbr.rel (0) target = $region59
    $region58: #{tpu_custom_call.1} parent=1 // pred_region
      %1372 = dma.done [#allocation5], 128
    $region59: #{tpu_custom_call.1} parent=1 // pred_fallthru
      _
    %1373 = vsyncpa [#allocation5], 1

</llo_original>
